<compile_context>
chip_gen: v5e
topology: v5e:2x2
jax: 0.10.0
libtpu: 0.0.40
codegen_flags: <defaults>
</compile_context>

<pallas_src>
import jax
import jax.numpy as jnp
from jax.experimental import pallas as pl
from jax.experimental.pallas import tpu as pltpu

# ------------- configuration (mirrors DereverbLoss.__init__, small instantiation) -------------
SR = 16000
DRY_WEIGHT = 3.0
RIR_WEIGHT = 1.0
TIME_WEIGHT = 1.0
FREQ_WEIGHT = 0.5
MEL_WEIGHT = 0.3
CONSISTENCY_WEIGHT = 0.2
RIR_REG_WEIGHT = 0.1
N_FFT = 128          # constructor parameter (small-shape instantiation)
HOP = N_FFT // 4
WIN = N_FFT
N_MELS = 16
EPS = 1e-8

N_FREQS = N_FFT // 2 + 1     # 65 real frequency bins
F_PAD = 128                  # lane-padded frequency width (zero cols contribute 0 to all sums)
T_BLK = 128                  # time block for the block-Toeplitz consistency convolution


# ----------------------------- Kernel 1: spectral losses -----------------------------
def _spectral_kernel(pf_ref, tf_ref, dft_ref, mel_ref,
                     mag_ref, cos_ref, mel_out_ref):
    # dft: (WIN, 2*F_PAD), window + normalization folded in, [cos | pad | sin | pad]
    dft = dft_ref[...]
    sp = jnp.dot(pf_ref[...], dft, preferred_element_type=jnp.float32)   # (TM, 2*F_PAD)
    st = jnp.dot(tf_ref[...], dft, preferred_element_type=jnp.float32)

    re_p = sp[:, :F_PAD]
    im_p = sp[:, F_PAD:]
    re_t = st[:, :F_PAD]
    im_t = st[:, F_PAD:]

    pw_p = re_p * re_p + im_p * im_p
    pw_t = re_t * re_t + im_t * im_t

    # magnitude L1 (padded freq cols are exactly zero for both -> contribute 0)
    mag_ref[...] = jnp.sum(
        jnp.abs(jnp.sqrt(pw_p) - jnp.sqrt(pw_t))).reshape(1, 1, 1)

    # cos(phase_p - phase_t) = (re_p*re_t + im_p*im_t) / (|p| |t|)  (EUP rsqrt)
    inv = jax.lax.rsqrt(jnp.maximum(pw_p * pw_t, 1e-24))
    cos_ref[...] = jnp.sum((re_p * re_t + im_p * im_t) * inv).reshape(1, 1, 1)

    # mel perceptual loss on normalized power spectrogram (mel fb zero-padded to 128 lanes;
    # padded mel cols are log(eps)-log(eps)=0)
    mel_fb = mel_ref[...]                                   # (F_PAD, F_PAD)
    mel_p = jnp.dot(pw_p, mel_fb, preferred_element_type=jnp.float32)
    mel_t = jnp.dot(pw_t, mel_fb, preferred_element_type=jnp.float32)
    mel_out_ref[...] = jnp.sum(
        jnp.abs(jnp.log(mel_p + EPS) - jnp.log(mel_t + EPS))).reshape(1, 1, 1)


def _spectral_sums(pf, tf, dft, mel_pad, tile_m):
    m_pad = pf.shape[0]
    grid_sz = m_pad // tile_m
    scalar_out = jax.ShapeDtypeStruct((grid_sz, 1, 1), jnp.float32)
    scalar_spec = pl.BlockSpec((1, 1, 1), lambda i: (i, 0, 0))
    partials = pl.pallas_call(
        _spectral_kernel,
        grid=(grid_sz,),
        in_specs=[
            pl.BlockSpec((tile_m, WIN), lambda i: (i, 0)),
            pl.BlockSpec((tile_m, WIN), lambda i: (i, 0)),
            pl.BlockSpec((WIN, 2 * F_PAD), lambda i: (0, 0)),
            pl.BlockSpec((F_PAD, F_PAD), lambda i: (0, 0)),
        ],
        out_specs=[scalar_spec, scalar_spec, scalar_spec],
        out_shape=[scalar_out, scalar_out, scalar_out],
        compiler_params=pltpu.CompilerParams(dimension_semantics=("parallel",)),
    )(pf, tf, dft, mel_pad)
    return [jnp.sum(p) for p in partials]


# -------------------- Kernel 2: time L1, consistency conv (MXU Toeplitz), RIR reg --------------------
def _time_kernel(dtoep_ref, toep_ref, pr_ref, td_ref, tr_ref, mix_ref, seg_ref,
                 cons_ref, dl1_ref, rl1_ref, sp_ref, en_ref):
    dtoep = dtoep_ref[0]                 # (nb, L)  shifted dry blocks, lag-major on lanes
    pd = dtoep[:, :T_BLK]                # (nb, T)  lag-0 columns == plain dry blocks
    pr = pr_ref[0]                       # (nb, T)
    td = td_ref[0]
    tr = tr_ref[0]
    mix = mix_ref[0]

    dl1_ref[...] = jnp.sum(jnp.abs(pd - td)).reshape(1, 1, 1)
    rl1_ref[...] = jnp.sum(jnp.abs(pr - tr)).reshape(1, 1, 1)
    sp_ref[...] = jnp.sum(jnp.abs(pr)).reshape(1, 1, 1)

    # per-segment energy sums (combined / relu'd across batch in the wrapper)
    rs = seg_ref[0]                      # (4, seg)
    en_ref[...] = jnp.sum(rs * rs, axis=-1, keepdims=True)[None]    # (1, 4, 1)

    # causal conv pred_dry * pred_rir truncated to L, as ONE block-Toeplitz MXU matmul:
    # rec[j, t] = sum_{d,s} dry[(j-d)*T + s] * rir[d*T + t - s]
    rec = jnp.dot(dtoep, toep_ref[0], preferred_element_type=jnp.float32)   # (nb, T)
    cons_ref[...] = jnp.sum(jnp.abs(rec - mix)).reshape(1, 1, 1)


def _time_conv_sums(dry_toepin, toep_flat, pr_b, td_b, tr_b, mix_b, rir_segs):
    n, nb, l_full = dry_toepin.shape
    seg = rir_segs.shape[-1]
    scalar_out = jax.ShapeDtypeStruct((n, 1, 1), jnp.float32)
    scalar_spec = pl.BlockSpec((1, 1, 1), lambda i: (i, 0, 0))
    en_out = jax.ShapeDtypeStruct((n, 4, 1), jnp.float32)
    en_spec = pl.BlockSpec((1, 4, 1), lambda i: (i, 0, 0))
    return pl.pallas_call(
        _time_kernel,
        grid=(n,),
        in_specs=[
            pl.BlockSpec((1, nb, l_full), lambda i: (i, 0, 0)),
            pl.BlockSpec((1, l_full, T_BLK), lambda i: (i, 0, 0)),
            pl.BlockSpec((1, nb, T_BLK), lambda i: (i, 0, 0)),
            pl.BlockSpec((1, nb, T_BLK), lambda i: (i, 0, 0)),
            pl.BlockSpec((1, nb, T_BLK), lambda i: (i, 0, 0)),
            pl.BlockSpec((1, nb, T_BLK), lambda i: (i, 0, 0)),
            pl.BlockSpec((1, 4, seg), lambda i: (i, 0, 0)),
        ],
        out_specs=[scalar_spec, scalar_spec, scalar_spec, scalar_spec, en_spec],
        out_shape=[scalar_out, scalar_out, scalar_out, scalar_out, en_out],
        compiler_params=pltpu.CompilerParams(dimension_semantics=("parallel",)),
    )(dry_toepin, toep_flat, pr_b, td_b, tr_b, mix_b, rir_segs)


# ----------------------------- parameter setup (glue, plain JAX) -----------------------------
def _hz_to_mel_htk(f):
    return 2595.0 * jnp.log10(1.0 + f / 700.0)


def _mel_to_hz_htk(m):
    return 700.0 * (10.0 ** (m / 2595.0) - 1.0)


def _melscale_fbanks(n_freqs, f_min, f_max, n_mels, sr):
    # torchaudio.functional.melscale_fbanks (htk scale, norm=None)
    all_freqs = jnp.linspace(0.0, sr / 2.0, n_freqs)
    m_min = _hz_to_mel_htk(jnp.asarray(f_min, jnp.float32))
    m_max = _hz_to_mel_htk(jnp.asarray(f_max, jnp.float32))
    m_pts = jnp.linspace(m_min, m_max, n_mels + 2)
    f_pts = _mel_to_hz_htk(m_pts)
    f_diff = f_pts[1:] - f_pts[:-1]
    slopes = f_pts[None, :] - all_freqs[:, None]            # (n_freqs, n_mels + 2)
    down = -slopes[:, :-2] / f_diff[:-1]
    up = slopes[:, 2:] / f_diff[1:]
    fb = jnp.maximum(0.0, jnp.minimum(down, up))
    return fb.astype(jnp.float32)                            # (n_freqs, n_mels)


# ----------------------------- full DereverbLoss forward -----------------------------
def dereverb_loss(pred_dry, pred_rir, target_dry, target_rir, mix):
    f32 = jnp.float32
    B, C, L = pred_dry.shape
    N = B * C
    assert L % T_BLK == 0, "signal length must be a multiple of 128"
    pd = pred_dry.reshape(N, L).astype(f32)
    pr = pred_rir.reshape(N, L).astype(f32)
    td = target_dry.reshape(N, L).astype(f32)
    tr = target_rir.reshape(N, L).astype(f32)
    mx = mix.reshape(N, L).astype(f32)

    # ----- STFT / mel setup (window + normalization folded into a fused lane-dense DFT matrix) -----
    pad = N_FFT // 2
    n_frames = 1 + L // HOP

    n = jnp.arange(WIN, dtype=f32)
    win = 0.5 - 0.5 * jnp.cos(2.0 * jnp.pi * n / WIN)        # periodic Hann (torch default)
    # torchaudio Spectrogram(normalized=True) -> "window" norm: divide STFT by sqrt(sum(win^2))
    win = win / jnp.sqrt(jnp.sum(win ** 2))

    t = jnp.arange(WIN, dtype=f32)[:, None]
    k = jnp.arange(N_FREQS, dtype=f32)[None, :]
    ang = 2.0 * jnp.pi * t * k / N_FFT
    cw = win[:, None] * jnp.cos(ang)                          # (WIN, F)
    sw = win[:, None] * jnp.sin(ang)                          # imag sign dropped (cancels in mag/cos)
    zpad = jnp.zeros((WIN, F_PAD - N_FREQS), f32)
    dft = jnp.concatenate([cw, zpad, sw, zpad], axis=1)       # (WIN, 2*F_PAD) lane-dense

    mel_fb = _melscale_fbanks(N_FREQS, 0.0, SR / 2.0, N_MELS, SR)   # (F, n_mels)
    mel_pad = jnp.zeros((F_PAD, F_PAD), f32).at[:N_FREQS, :N_MELS].set(mel_fb)

    def frame(x):
        xp = jnp.pad(x, ((0, 0), (pad, pad)), mode="reflect")
        idx = jnp.arange(n_frames)[:, None] * HOP + jnp.arange(N_FFT)[None, :]
        return xp[:, idx].reshape(N * n_frames, N_FFT)

    # TODO(synk): build frames in-kernel from the padded signal to avoid the ~4x framed copy.
    pf = frame(pd)
    tf = frame(td)

    M = N * n_frames
    tile_m = 256 if M >= 256 else ((M + 7) // 8) * 8          # sized for 64 MiB-VMEM chips too
    m_pad = ((M + tile_m - 1) // tile_m) * tile_m
    pf = jnp.pad(pf, ((0, m_pad - M), (0, 0)))                # zero frame rows contribute 0
    tf = jnp.pad(tf, ((0, m_pad - M), (0, 0)))

    mag_sum, cos_sum, mel_sum = _spectral_sums(pf, tf, dft, mel_pad, tile_m)

    # ----- time / consistency / RIR-reg kernel (lane-dense blocks of 128 time samples) -----
    nb = L // T_BLK
    dry_b = pd.reshape(N, nb, T_BLK)
    pr_b = pr.reshape(N, nb, T_BLK)
    td_b = td.reshape(N, nb, T_BLK)
    tr_b = tr.reshape(N, nb, T_BLK)
    mix_b = mx.reshape(N, nb, T_BLK)
    seg = L // 4
    rir_segs = pr.reshape(N, 4, seg)

    # shifted dry blocks: dry_toepin[n, j, d*T + s] = dry[n, (j-d)*T + s] if j >= d else 0
    j_idx = jnp.arange(nb)[:, None]
    d_idx = jnp.arange(nb)[None, :]
    src = j_idx - d_idx
    valid = (src >= 0).astype(f32)
    dry_sh = dry_b[:, jnp.clip(src, 0, nb - 1), :] * valid[None, :, :, None]   # (N, nb, nb, T)
    dry_toepin = dry_sh.reshape(N, nb, nb * T_BLK)                              # (N, nb, L)

    # Toeplitz lag blocks: toep_flat[n, d*T + s, t] = rir[n, d*T + t - s] (0 outside [0, L))
    d3 = jnp.arange(nb)[:, None, None]
    s3 = jnp.arange(T_BLK)[None, :, None]
    t3 = jnp.arange(T_BLK)[None, None, :]
    ridx = d3 * T_BLK + t3 - s3
    rvalid = ((ridx >= 0) & (ridx < L)).astype(f32)
    toep = pr[:, jnp.clip(ridx, 0, L - 1)] * rvalid[None]                       # (N, nb, T, T)
    toep_flat = toep.reshape(N, L, T_BLK)                                       # (N, L, T)

    cons_p, dl1_p, rl1_p, sp_p, en_p = _time_conv_sums(
        dry_toepin, toep_flat, pr_b, td_b, tr_b, mix_b, rir_segs)

    # ----- combine partial sums -----
    n_time = float(N * L)
    n_spec = float(N * n_frames * N_FREQS)
    n_mel = float(N * n_frames * N_MELS)

    dry_time_loss = jnp.sum(dl1_p) / n_time
    rir_time_loss = jnp.sum(rl1_p) / n_time
    consist_loss = jnp.sum(cons_p) / n_time
    sparsity = jnp.sum(sp_p) / n_time

    energies = jnp.sum(en_p[:, :, 0], axis=0) / float(N * seg)                  # (4,)
    decay = (jnp.maximum(energies[1] - 0.8 * energies[0], 0.0)
             + jnp.maximum(energies[2] - 0.8 * energies[1], 0.0)
             + jnp.maximum(energies[3] - 0.8 * energies[2], 0.0))
    rir_reg_loss = sparsity + decay

    mag_loss = mag_sum / n_spec
    phase_loss = 1.0 - cos_sum / n_spec
    dry_freq_loss = mag_loss + 0.1 * phase_loss
    dry_mel_loss = mel_sum / n_mel

    total_dry_loss = (TIME_WEIGHT * dry_time_loss + FREQ_WEIGHT * dry_freq_loss
                      + MEL_WEIGHT * dry_mel_loss)
    total_rir_loss = rir_time_loss + RIR_REG_WEIGHT * rir_reg_loss
    total_loss = (DRY_WEIGHT * total_dry_loss + RIR_WEIGHT * total_rir_loss
                  + CONSISTENCY_WEIGHT * consist_loss)

    loss_dict = {
        "total_loss": total_loss,
        "dry_time_loss": dry_time_loss,
        "dry_freq_loss": dry_freq_loss,
        "dry_mel_loss": dry_mel_loss,
        "rir_time_loss": rir_time_loss,
        "rir_reg_loss": rir_reg_loss,
        "consistency_loss": consist_loss,
        "total_dry_loss": total_dry_loss,
        "total_rir_loss": total_rir_loss,
    }
    return total_loss, loss_dict


if __name__ == "__main__":
    B, C, L = 2, 1, 256
    key = jax.random.PRNGKey(0)
    k1, k2, k3, k4, k5 = jax.random.split(key, 5)
    pred_dry = 0.1 * jax.random.normal(k1, (B, C, L), jnp.float32)
    pred_rir = 0.1 * jax.random.normal(k2, (B, C, L), jnp.float32)
    target_dry = 0.1 * jax.random.normal(k3, (B, C, L), jnp.float32)
    target_rir = 0.1 * jax.random.normal(k4, (B, C, L), jnp.float32)
    mix = 0.1 * jax.random.normal(k5, (B, C, L), jnp.float32)

    total, loss_dict = jax.jit(dereverb_loss)(pred_dry, pred_rir, target_dry, target_rir, mix)
    total = jax.block_until_ready(total)
    jax.block_until_ready(loss_dict)
    assert bool(jnp.isfinite(total)), "non-finite loss"
    print("KERNEL_OK")
</pallas_src>

<mosaic_0001>
module attributes {stable_mosaic.version = 11 : i64} {
  func.func @_time_kernel(%arg0: i32, %arg1: memref<1x2x256xf32, #tpu.memory_space<vmem>>, %arg2: memref<1x256x128xf32, #tpu.memory_space<vmem>>, %arg3: memref<1x2x128xf32, #tpu.memory_space<vmem>>, %arg4: memref<1x2x128xf32, #tpu.memory_space<vmem>>, %arg5: memref<1x2x128xf32, #tpu.memory_space<vmem>>, %arg6: memref<1x2x128xf32, #tpu.memory_space<vmem>>, %arg7: memref<1x4x64xf32, #tpu.memory_space<vmem>>, %arg8: memref<1x1x1xf32, #tpu.memory_space<vmem>>, %arg9: memref<1x1x1xf32, #tpu.memory_space<vmem>>, %arg10: memref<1x1x1xf32, #tpu.memory_space<vmem>>, %arg11: memref<1x1x1xf32, #tpu.memory_space<vmem>>, %arg12: memref<1x4x1xf32, #tpu.memory_space<vmem>>) attributes {dimension_semantics = [#tpu.dimension_semantics<parallel>], iteration_bounds = array<i64: 2>, scalar_prefetch = 0 : i64, scratch_operands = 0 : i64, tpu.core_type = #tpu.core_type<tc>, window_params = [{transform_indices = @transform_0, window_bounds = array<i64: 1, 2, 256>}, {transform_indices = @transform_1, window_bounds = array<i64: 1, 256, 128>}, {transform_indices = @transform_2, window_bounds = array<i64: 1, 2, 128>}, {transform_indices = @transform_3, window_bounds = array<i64: 1, 2, 128>}, {transform_indices = @transform_4, window_bounds = array<i64: 1, 2, 128>}, {transform_indices = @transform_5, window_bounds = array<i64: 1, 2, 128>}, {transform_indices = @transform_6, window_bounds = array<i64: 1, 4, 64>}, {transform_indices = @transform_7, window_bounds = array<i64: 1, 1, 1>}, {transform_indices = @transform_8, window_bounds = array<i64: 1, 1, 1>}, {transform_indices = @transform_9, window_bounds = array<i64: 1, 1, 1>}, {transform_indices = @transform_10, window_bounds = array<i64: 1, 1, 1>}, {transform_indices = @transform_11, window_bounds = array<i64: 1, 4, 1>}]} {
    %c0 = arith.constant 0 : index
    %c0_0 = arith.constant 0 : index
    %c0_1 = arith.constant 0 : index
    %0 = vector.load %arg1[%c0, %c0_0, %c0_1] : memref<1x2x256xf32, #tpu.memory_space<vmem>>, vector<1x2x256xf32>
    %1 = vector.shape_cast %0 : vector<1x2x256xf32> to vector<2x256xf32>
    %2 = vector.extract_strided_slice %1 {offsets = [0, 0], sizes = [2, 128], strides = [1, 1]} : vector<2x256xf32> to vector<2x128xf32>
    %c0_2 = arith.constant 0 : index
    %c0_3 = arith.constant 0 : index
    %c0_4 = arith.constant 0 : index
    %3 = vector.load %arg3[%c0_2, %c0_3, %c0_4] : memref<1x2x128xf32, #tpu.memory_space<vmem>>, vector<1x2x128xf32>
    %4 = vector.shape_cast %3 : vector<1x2x128xf32> to vector<2x128xf32>
    %c0_5 = arith.constant 0 : index
    %c0_6 = arith.constant 0 : index
    %c0_7 = arith.constant 0 : index
    %5 = vector.load %arg4[%c0_5, %c0_6, %c0_7] : memref<1x2x128xf32, #tpu.memory_space<vmem>>, vector<1x2x128xf32>
    %6 = vector.shape_cast %5 : vector<1x2x128xf32> to vector<2x128xf32>
    %c0_8 = arith.constant 0 : index
    %c0_9 = arith.constant 0 : index
    %c0_10 = arith.constant 0 : index
    %7 = vector.load %arg5[%c0_8, %c0_9, %c0_10] : memref<1x2x128xf32, #tpu.memory_space<vmem>>, vector<1x2x128xf32>
    %8 = vector.shape_cast %7 : vector<1x2x128xf32> to vector<2x128xf32>
    %c0_11 = arith.constant 0 : index
    %c0_12 = arith.constant 0 : index
    %c0_13 = arith.constant 0 : index
    %9 = vector.load %arg6[%c0_11, %c0_12, %c0_13] : memref<1x2x128xf32, #tpu.memory_space<vmem>>, vector<1x2x128xf32>
    %10 = vector.shape_cast %9 : vector<1x2x128xf32> to vector<2x128xf32>
    %11 = arith.subf %2, %6 : vector<2x128xf32>
    %12 = math.absf %11 : vector<2x128xf32>
    %13 = vector.shape_cast %12 : vector<2x128xf32> to vector<1x2x128xf32>
    %cst = arith.constant dense<0.000000e+00> : vector<1xf32>
    %14 = vector.multi_reduction <add>, %13, %cst [1, 2] : vector<1x2x128xf32> to vector<1xf32>
    %15 = vector.shape_cast %14 : vector<1xf32> to vector<1x1x1xf32>
    %16 = vector.extract %15[0, 0, 0] : f32 from vector<1x1x1xf32>
    %17 = vector.broadcast %16 : f32 to vector<1x1x1xf32>
    %c0_14 = arith.constant 0 : index
    %c0_15 = arith.constant 0 : index
    %c0_16 = arith.constant 0 : index
    %18 = vector.load %arg9[%c0_14, %c0_15, %c0_16] : memref<1x1x1xf32, #tpu.memory_space<vmem>>, vector<1x1x1xf32>
    tpu.vector_store %arg9[%c0_14, %c0_15, %c0_16], %17 {strides = array<i32>} : memref<1x1x1xf32, #tpu.memory_space<vmem>>, vector<1x1x1xf32>,
    %19 = arith.subf %4, %8 : vector<2x128xf32>
    %20 = math.absf %19 : vector<2x128xf32>
    %21 = vector.shape_cast %20 : vector<2x128xf32> to vector<1x2x128xf32>
    %cst_17 = arith.constant dense<0.000000e+00> : vector<1xf32>
    %22 = vector.multi_reduction <add>, %21, %cst_17 [1, 2] : vector<1x2x128xf32> to vector<1xf32>
    %23 = vector.shape_cast %22 : vector<1xf32> to vector<1x1x1xf32>
    %24 = vector.extract %23[0, 0, 0] : f32 from vector<1x1x1xf32>
    %25 = vector.broadcast %24 : f32 to vector<1x1x1xf32>
    %c0_18 = arith.constant 0 : index
    %c0_19 = arith.constant 0 : index
    %c0_20 = arith.constant 0 : index
    %26 = vector.load %arg10[%c0_18, %c0_19, %c0_20] : memref<1x1x1xf32, #tpu.memory_space<vmem>>, vector<1x1x1xf32>
    tpu.vector_store %arg10[%c0_18, %c0_19, %c0_20], %25 {strides = array<i32>} : memref<1x1x1xf32, #tpu.memory_space<vmem>>, vector<1x1x1xf32>,
    %27 = math.absf %4 : vector<2x128xf32>
    %28 = vector.shape_cast %27 : vector<2x128xf32> to vector<1x2x128xf32>
    %cst_21 = arith.constant dense<0.000000e+00> : vector<1xf32>
    %29 = vector.multi_reduction <add>, %28, %cst_21 [1, 2] : vector<1x2x128xf32> to vector<1xf32>
    %30 = vector.shape_cast %29 : vector<1xf32> to vector<1x1x1xf32>
    %31 = vector.extract %30[0, 0, 0] : f32 from vector<1x1x1xf32>
    %32 = vector.broadcast %31 : f32 to vector<1x1x1xf32>
    %c0_22 = arith.constant 0 : index
    %c0_23 = arith.constant 0 : index
    %c0_24 = arith.constant 0 : index
    %33 = vector.load %arg11[%c0_22, %c0_23, %c0_24] : memref<1x1x1xf32, #tpu.memory_space<vmem>>, vector<1x1x1xf32>
    tpu.vector_store %arg11[%c0_22, %c0_23, %c0_24], %32 {strides = array<i32>} : memref<1x1x1xf32, #tpu.memory_space<vmem>>, vector<1x1x1xf32>,
    %c0_25 = arith.constant 0 : index
    %c0_26 = arith.constant 0 : index
    %c0_27 = arith.constant 0 : index
    %34 = vector.load %arg7[%c0_25, %c0_26, %c0_27] : memref<1x4x64xf32, #tpu.memory_space<vmem>>, vector<1x4x64xf32>
    %35 = vector.shape_cast %34 : vector<1x4x64xf32> to vector<4x64xf32>
    %36 = arith.mulf %35, %35 : vector<4x64xf32>
    %cst_28 = arith.constant dense<0.000000e+00> : vector<4xf32>
    %37 = vector.multi_reduction <add>, %36, %cst_28 [1] : vector<4x64xf32> to vector<4xf32>
    %38 = vector.shape_cast %37 : vector<4xf32> to vector<4x1xf32>
    %39 = vector.shape_cast %38 : vector<4x1xf32> to vector<1x4x1xf32>
    %c0_29 = arith.constant 0 : index
    %c0_30 = arith.constant 0 : index
    %c0_31 = arith.constant 0 : index
    %40 = vector.load %arg12[%c0_29, %c0_30, %c0_31] : memref<1x4x1xf32, #tpu.memory_space<vmem>>, vector<1x4x1xf32>
    tpu.vector_store %arg12[%c0_29, %c0_30, %c0_31], %39 {strides = array<i32>} : memref<1x4x1xf32, #tpu.memory_space<vmem>>, vector<1x4x1xf32>,
    %c0_32 = arith.constant 0 : index
    %c0_33 = arith.constant 0 : index
    %c0_34 = arith.constant 0 : index
    %41 = vector.load %arg2[%c0_32, %c0_33, %c0_34] : memref<1x256x128xf32, #tpu.memory_space<vmem>>, vector<1x256x128xf32>
    %42 = vector.shape_cast %41 : vector<1x256x128xf32> to vector<256x128xf32>
    %cst_35 = arith.constant dense<0.000000e+00> : vector<2x128xf32>
    %43 = tpu.matmul %1, %42, %cst_35 {dimension_numbers = #tpu.dot_dimension_numbers<[1], [0], [0], [1], [0, 0, 1, 1], [], []>} : vector<2x256xf32>, vector<256x128xf32>, vector<2x128xf32> -> vector<2x128xf32>
    %44 = arith.subf %43, %10 : vector<2x128xf32>
    %45 = math.absf %44 : vector<2x128xf32>
    %46 = vector.shape_cast %45 : vector<2x128xf32> to vector<1x2x128xf32>
    %cst_36 = arith.constant dense<0.000000e+00> : vector<1xf32>
    %47 = vector.multi_reduction <add>, %46, %cst_36 [1, 2] : vector<1x2x128xf32> to vector<1xf32>
    %48 = vector.shape_cast %47 : vector<1xf32> to vector<1x1x1xf32>
    %49 = vector.extract %48[0, 0, 0] : f32 from vector<1x1x1xf32>
    %50 = vector.broadcast %49 : f32 to vector<1x1x1xf32>
    %c0_37 = arith.constant 0 : index
    %c0_38 = arith.constant 0 : index
    %c0_39 = arith.constant 0 : index
    %51 = vector.load %arg8[%c0_37, %c0_38, %c0_39] : memref<1x1x1xf32, #tpu.memory_space<vmem>>, vector<1x1x1xf32>
    tpu.vector_store %arg8[%c0_37, %c0_38, %c0_39], %50 {strides = array<i32>} : memref<1x1x1xf32, #tpu.memory_space<vmem>>, vector<1x1x1xf32>,
    return
  }
  func.func @transform_0(%arg0: i32) -> (i32, i32, i32) {
    %c0_i32 = arith.constant 0 : i32
    %c0_i32_0 = arith.constant 0 : i32
    %c0_i32_1 = arith.constant 0 : i32
    return %arg0, %c0_i32, %c0_i32_0 : i32, i32, i32
  }
  func.func @transform_1(%arg0: i32) -> (i32, i32, i32) {
    %c0_i32 = arith.constant 0 : i32
    %c0_i32_0 = arith.constant 0 : i32
    %c0_i32_1 = arith.constant 0 : i32
    return %arg0, %c0_i32, %c0_i32_0 : i32, i32, i32
  }
  func.func @transform_2(%arg0: i32) -> (i32, i32, i32) {
    %c0_i32 = arith.constant 0 : i32
    %c0_i32_0 = arith.constant 0 : i32
    %c0_i32_1 = arith.constant 0 : i32
    return %arg0, %c0_i32, %c0_i32_0 : i32, i32, i32
  }
  func.func @transform_3(%arg0: i32) -> (i32, i32, i32) {
    %c0_i32 = arith.constant 0 : i32
    %c0_i32_0 = arith.constant 0 : i32
    %c0_i32_1 = arith.constant 0 : i32
    return %arg0, %c0_i32, %c0_i32_0 : i32, i32, i32
  }
  func.func @transform_4(%arg0: i32) -> (i32, i32, i32) {
    %c0_i32 = arith.constant 0 : i32
    %c0_i32_0 = arith.constant 0 : i32
    %c0_i32_1 = arith.constant 0 : i32
    return %arg0, %c0_i32, %c0_i32_0 : i32, i32, i32
  }
  func.func @transform_5(%arg0: i32) -> (i32, i32, i32) {
    %c0_i32 = arith.constant 0 : i32
    %c0_i32_0 = arith.constant 0 : i32
    %c0_i32_1 = arith.constant 0 : i32
    return %arg0, %c0_i32, %c0_i32_0 : i32, i32, i32
  }
  func.func @transform_6(%arg0: i32) -> (i32, i32, i32) {
    %c0_i32 = arith.constant 0 : i32
    %c0_i32_0 = arith.constant 0 : i32
    %c0_i32_1 = arith.constant 0 : i32
    return %arg0, %c0_i32, %c0_i32_0 : i32, i32, i32
  }
  func.func @transform_7(%arg0: i32) -> (i32, i32, i32) {
    %c0_i32 = arith.constant 0 : i32
    %c0_i32_0 = arith.constant 0 : i32
    %c0_i32_1 = arith.constant 0 : i32
    return %arg0, %c0_i32, %c0_i32_0 : i32, i32, i32
  }
  func.func @transform_8(%arg0: i32) -> (i32, i32, i32) {
    %c0_i32 = arith.constant 0 : i32
    %c0_i32_0 = arith.constant 0 : i32
    %c0_i32_1 = arith.constant 0 : i32
    return %arg0, %c0_i32, %c0_i32_0 : i32, i32, i32
  }
  func.func @transform_9(%arg0: i32) -> (i32, i32, i32) {
    %c0_i32 = arith.constant 0 : i32
    %c0_i32_0 = arith.constant 0 : i32
    %c0_i32_1 = arith.constant 0 : i32
    return %arg0, %c0_i32, %c0_i32_0 : i32, i32, i32
  }
  func.func @transform_10(%arg0: i32) -> (i32, i32, i32) {
    %c0_i32 = arith.constant 0 : i32
    %c0_i32_0 = arith.constant 0 : i32
    %c0_i32_1 = arith.constant 0 : i32
    return %arg0, %c0_i32, %c0_i32_0 : i32, i32, i32
  }
  func.func @transform_11(%arg0: i32) -> (i32, i32, i32) {
    %c0_i32 = arith.constant 0 : i32
    %c0_i32_0 = arith.constant 0 : i32
    %c0_i32_1 = arith.constant 0 : i32
    return %arg0, %c0_i32, %c0_i32_0 : i32, i32, i32
  }
}

module attributes {stable_mosaic.version = 11 : i64} {
  func.func @_spectral_kernel(%arg0: i32, %arg1: memref<24x128xf32, #tpu.memory_space<vmem>>, %arg2: memref<24x128xf32, #tpu.memory_space<vmem>>, %arg3: memref<128x256xf32, #tpu.memory_space<vmem>>, %arg4: memref<128x128xf32, #tpu.memory_space<vmem>>, %arg5: memref<1x1x1xf32, #tpu.memory_space<vmem>>, %arg6: memref<1x1x1xf32, #tpu.memory_space<vmem>>, %arg7: memref<1x1x1xf32, #tpu.memory_space<vmem>>) attributes {dimension_semantics = [#tpu.dimension_semantics<parallel>], iteration_bounds = array<i64: 1>, scalar_prefetch = 0 : i64, scratch_operands = 0 : i64, tpu.core_type = #tpu.core_type<tc>, window_params = [{transform_indices = @transform_0, window_bounds = array<i64: 24, 128>}, {transform_indices = @transform_1, window_bounds = array<i64: 24, 128>}, {pipeline_mode = #tpu.pipeline_mode<synchronous>, transform_indices = @transform_2, window_bounds = array<i64: 128, 256>}, {pipeline_mode = #tpu.pipeline_mode<synchronous>, transform_indices = @transform_3, window_bounds = array<i64: 128, 128>}, {transform_indices = @transform_4, window_bounds = array<i64: 1, 1, 1>}, {transform_indices = @transform_5, window_bounds = array<i64: 1, 1, 1>}, {transform_indices = @transform_6, window_bounds = array<i64: 1, 1, 1>}]} {
    %c0 = arith.constant 0 : index
    %c0_0 = arith.constant 0 : index
    %0 = vector.load %arg3[%c0, %c0_0] : memref<128x256xf32, #tpu.memory_space<vmem>>, vector<128x256xf32>
    %c0_1 = arith.constant 0 : index
    %c0_2 = arith.constant 0 : index
    %1 = vector.load %arg1[%c0_1, %c0_2] : memref<24x128xf32, #tpu.memory_space<vmem>>, vector<24x128xf32>
    %cst = arith.constant dense<0.000000e+00> : vector<24x256xf32>
    %2 = tpu.matmul %1, %0, %cst {dimension_numbers = #tpu.dot_dimension_numbers<[1], [0], [0], [1], [0, 0, 1, 1], [], []>} : vector<24x128xf32>, vector<128x256xf32>, vector<24x256xf32> -> vector<24x256xf32>
    %c0_3 = arith.constant 0 : index
    %c0_4 = arith.constant 0 : index
    %3 = vector.load %arg2[%c0_3, %c0_4] : memref<24x128xf32, #tpu.memory_space<vmem>>, vector<24x128xf32>
    %cst_5 = arith.constant dense<0.000000e+00> : vector<24x256xf32>
    %4 = tpu.matmul %3, %0, %cst_5 {dimension_numbers = #tpu.dot_dimension_numbers<[1], [0], [0], [1], [0, 0, 1, 1], [], []>} : vector<24x128xf32>, vector<128x256xf32>, vector<24x256xf32> -> vector<24x256xf32>
    %5 = vector.extract_strided_slice %2 {offsets = [0, 0], sizes = [24, 128], strides = [1, 1]} : vector<24x256xf32> to vector<24x128xf32>
    %6 = vector.extract_strided_slice %2 {offsets = [0, 128], sizes = [24, 128], strides = [1, 1]} : vector<24x256xf32> to vector<24x128xf32>
    %7 = vector.extract_strided_slice %4 {offsets = [0, 0], sizes = [24, 128], strides = [1, 1]} : vector<24x256xf32> to vector<24x128xf32>
    %8 = vector.extract_strided_slice %4 {offsets = [0, 128], sizes = [24, 128], strides = [1, 1]} : vector<24x256xf32> to vector<24x128xf32>
    %9 = arith.mulf %5, %5 : vector<24x128xf32>
    %10 = arith.mulf %6, %6 : vector<24x128xf32>
    %11 = arith.addf %9, %10 : vector<24x128xf32>
    %12 = arith.mulf %7, %7 : vector<24x128xf32>
    %13 = arith.mulf %8, %8 : vector<24x128xf32>
    %14 = arith.addf %12, %13 : vector<24x128xf32>
    %15 = math.sqrt %11 : vector<24x128xf32>
    %16 = math.sqrt %14 : vector<24x128xf32>
    %17 = arith.subf %15, %16 : vector<24x128xf32>
    %18 = math.absf %17 : vector<24x128xf32>
    %19 = vector.shape_cast %18 : vector<24x128xf32> to vector<1x24x128xf32>
    %cst_6 = arith.constant dense<0.000000e+00> : vector<1xf32>
    %20 = vector.multi_reduction <add>, %19, %cst_6 [1, 2] : vector<1x24x128xf32> to vector<1xf32>
    %21 = vector.shape_cast %20 : vector<1xf32> to vector<1x1x1xf32>
    %22 = vector.extract %21[0, 0, 0] : f32 from vector<1x1x1xf32>
    %23 = vector.broadcast %22 : f32 to vector<1x1x1xf32>
    %c0_7 = arith.constant 0 : index
    %c0_8 = arith.constant 0 : index
    %c0_9 = arith.constant 0 : index
    %24 = vector.load %arg5[%c0_7, %c0_8, %c0_9] : memref<1x1x1xf32, #tpu.memory_space<vmem>>, vector<1x1x1xf32>
    tpu.vector_store %arg5[%c0_7, %c0_8, %c0_9], %23 {strides = array<i32>} : memref<1x1x1xf32, #tpu.memory_space<vmem>>, vector<1x1x1xf32>,
    %25 = arith.mulf %11, %14 : vector<24x128xf32>
    %cst_10 = arith.constant 1.000000e-24 : f32
    %26 = vector.broadcast %cst_10 : f32 to vector<24x128xf32>
    %27 = arith.maximumf %25, %26 : vector<24x128xf32>
    %28 = math.rsqrt %27 : vector<24x128xf32>
    %29 = arith.mulf %5, %7 : vector<24x128xf32>
    %30 = arith.mulf %6, %8 : vector<24x128xf32>
    %31 = arith.addf %29, %30 : vector<24x128xf32>
    %32 = arith.mulf %31, %28 : vector<24x128xf32>
    %33 = vector.shape_cast %32 : vector<24x128xf32> to vector<1x24x128xf32>
    %cst_11 = arith.constant dense<0.000000e+00> : vector<1xf32>
    %34 = vector.multi_reduction <add>, %33, %cst_11 [1, 2] : vector<1x24x128xf32> to vector<1xf32>
    %35 = vector.shape_cast %34 : vector<1xf32> to vector<1x1x1xf32>
    %36 = vector.extract %35[0, 0, 0] : f32 from vector<1x1x1xf32>
    %37 = vector.broadcast %36 : f32 to vector<1x1x1xf32>
    %c0_12 = arith.constant 0 : index
    %c0_13 = arith.constant 0 : index
    %c0_14 = arith.constant 0 : index
    %38 = vector.load %arg6[%c0_12, %c0_13, %c0_14] : memref<1x1x1xf32, #tpu.memory_space<vmem>>, vector<1x1x1xf32>
    tpu.vector_store %arg6[%c0_12, %c0_13, %c0_14], %37 {strides = array<i32>} : memref<1x1x1xf32, #tpu.memory_space<vmem>>, vector<1x1x1xf32>,
    %c0_15 = arith.constant 0 : index
    %c0_16 = arith.constant 0 : index
    %39 = vector.load %arg4[%c0_15, %c0_16] : memref<128x128xf32, #tpu.memory_space<vmem>>, vector<128x128xf32>
    %cst_17 = arith.constant dense<0.000000e+00> : vector<24x128xf32>
    %40 = tpu.matmul %11, %39, %cst_17 {dimension_numbers = #tpu.dot_dimension_numbers<[1], [0], [0], [1], [0, 0, 1, 1], [], []>} : vector<24x128xf32>, vector<128x128xf32>, vector<24x128xf32> -> vector<24x128xf32>
    %cst_18 = arith.constant dense<0.000000e+00> : vector<24x128xf32>
    %41 = tpu.matmul %14, %39, %cst_18 {dimension_numbers = #tpu.dot_dimension_numbers<[1], [0], [0], [1], [0, 0, 1, 1], [], []>} : vector<24x128xf32>, vector<128x128xf32>, vector<24x128xf32> -> vector<24x128xf32>
    %cst_19 = arith.constant 9.99999993E-9 : f32
    %42 = vector.broadcast %cst_19 : f32 to vector<24x128xf32>
    %43 = arith.addf %40, %42 : vector<24x128xf32>
    %44 = math.log %43 : vector<24x128xf32>
    %cst_20 = arith.constant 9.99999993E-9 : f32
    %45 = vector.broadcast %cst_20 : f32 to vector<24x128xf32>
    %46 = arith.addf %41, %45 : vector<24x128xf32>
    %47 = math.log %46 : vector<24x128xf32>
    %48 = arith.subf %44, %47 : vector<24x128xf32>
    %49 = math.absf %48 : vector<24x128xf32>
    %50 = vector.shape_cast %49 : vector<24x128xf32> to vector<1x24x128xf32>
    %cst_21 = arith.constant dense<0.000000e+00> : vector<1xf32>
    %51 = vector.multi_reduction <add>, %50, %cst_21 [1, 2] : vector<1x24x128xf32> to vector<1xf32>
    %52 = vector.shape_cast %51 : vector<1xf32> to vector<1x1x1xf32>
    %53 = vector.extract %52[0, 0, 0] : f32 from vector<1x1x1xf32>
    %54 = vector.broadcast %53 : f32 to vector<1x1x1xf32>
    %c0_22 = arith.constant 0 : index
    %c0_23 = arith.constant 0 : index
    %c0_24 = arith.constant 0 : index
    %55 = vector.load %arg7[%c0_22, %c0_23, %c0_24] : memref<1x1x1xf32, #tpu.memory_space<vmem>>, vector<1x1x1xf32>
    tpu.vector_store %arg7[%c0_22, %c0_23, %c0_24], %54 {strides = array<i32>} : memref<1x1x1xf32, #tpu.memory_space<vmem>>, vector<1x1x1xf32>,
    return
  }
  func.func @transform_0(%arg0: i32) -> (i32, i32) {
    %c0_i32 = arith.constant 0 : i32
    %c0_i32_0 = arith.constant 0 : i32
    return %arg0, %c0_i32 : i32, i32
  }
  func.func @transform_1(%arg0: i32) -> (i32, i32) {
    %c0_i32 = arith.constant 0 : i32
    %c0_i32_0 = arith.constant 0 : i32
    return %arg0, %c0_i32 : i32, i32
  }
  func.func @transform_2(%arg0: i32) -> (i32, i32) {
    %c0_i32 = arith.constant 0 : i32
    %c0_i32_0 = arith.constant 0 : i32
    %c0_i32_1 = arith.constant 0 : i32
    return %c0_i32, %c0_i32_0 : i32, i32
  }
  func.func @transform_3(%arg0: i32) -> (i32, i32) {
    %c0_i32 = arith.constant 0 : i32
    %c0_i32_0 = arith.constant 0 : i32
    %c0_i32_1 = arith.constant 0 : i32
    return %c0_i32, %c0_i32_0 : i32, i32
  }
  func.func @transform_4(%arg0: i32) -> (i32, i32, i32) {
    %c0_i32 = arith.constant 0 : i32
    %c0_i32_0 = arith.constant 0 : i32
    %c0_i32_1 = arith.constant 0 : i32
    return %arg0, %c0_i32, %c0_i32_0 : i32, i32, i32
  }
  func.func @transform_5(%arg0: i32) -> (i32, i32, i32) {
    %c0_i32 = arith.constant 0 : i32
    %c0_i32_0 = arith.constant 0 : i32
    %c0_i32_1 = arith.constant 0 : i32
    return %arg0, %c0_i32, %c0_i32_0 : i32, i32, i32
  }
  func.func @transform_6(%arg0: i32) -> (i32, i32, i32) {
    %c0_i32 = arith.constant 0 : i32
    %c0_i32_0 = arith.constant 0 : i32
    %c0_i32_1 = arith.constant 0 : i32
    return %arg0, %c0_i32, %c0_i32_0 : i32, i32, i32
  }
}

</mosaic_0001>

<llo_original>
// kernel: dereverb_loss.3
$region0: #{dereverb_loss.3}
  #allocation0 [shape = 'u32[]', space=smem, size = 0x4, offset = 0x4, fixed_abs, tag = 'smem constant byte address 0x4 - core index']
  #allocation1 [shape = 'u32[72,128]{1,0:T(1,128)}', space=vmem, size = 0x9000, scoped, tag = 'internal scratch']
  %s0 = inlined_call_operand.vmem [shape: f32[2,2,256], index: 0, kind: input, shape index: {}]
  %s1 = inlined_call_operand.vmem [shape: f32[2,256,128], index: 1, kind: input, shape index: {}]
  %s2 = inlined_call_operand.vmem [shape: f32[2,2,128], index: 2, kind: input, shape index: {}]
  %s3 = inlined_call_operand.vmem [shape: f32[2,2,128], index: 3, kind: input, shape index: {}]
  %s4 = inlined_call_operand.vmem [shape: f32[2,2,128], index: 4, kind: input, shape index: {}]
  %s5 = inlined_call_operand.vmem [shape: f32[2,2,128], index: 5, kind: input, shape index: {}]
  %s6 = inlined_call_operand.vmem [shape: f32[2,4,64], index: 6, kind: input, shape index: {}]
  %s7 = inlined_call_operand.vmem [shape: f32[2,1,1], index: 7, kind: output, shape index: {0}]
  %s8 = inlined_call_operand.vmem [shape: f32[2,1,1], index: 8, kind: output, shape index: {1}]
  %s9 = inlined_call_operand.vmem [shape: f32[2,1,1], index: 9, kind: output, shape index: {2}]
  %s10 = inlined_call_operand.vmem [shape: f32[2,1,1], index: 10, kind: output, shape index: {3}]
  %s11 = inlined_call_operand.vmem [shape: f32[2,4,1], index: 11, kind: output, shape index: {4}]
  %12 = xla_tuple %s7, %s8, %s9, %s10, %s11
  %s13 = sld [smem:[#allocation0]]
  $region93: #{dereverb_loss.3} parent=0
    _
  %s15 = ssub.s32 1, %s13
  %s16 = scalar_select 0, %s15, %s13
  loop: start=0, step=1, limit=4
  $region2: #{dereverb_loss.3} parent=0 // loop_pre_header
    _
  $region3: #{dereverb_loss.3} parent=0 // loop_header
    %s18 = sphi 0, %s22
    %p19 = scmp.ge.s32.totalorder %s18, 4
    %s28 = sphi 0, %s30
    %s31 = sphi 0, %s28
    %s32 = sphi 0, %s31
    %s48 = sphi 0, %s32
    %s54 = sphi 0, %s56
    %s57 = sphi 0, %s54
    %s58 = sphi 0, %s57
    %s74 = sphi 0, %s58
    %s80 = sphi 0, %s82
    %s83 = sphi 0, %s80
    %s84 = sphi 0, %s83
    %s100 = sphi 0, %s84
    %s106 = sphi 0, %s108
    %s109 = sphi 0, %s106
    %s110 = sphi 0, %s109
    %s126 = sphi 0, %s110
    %s132 = sphi 0, %s134
    %s135 = sphi 0, %s132
    %s136 = sphi 0, %s135
    %s152 = sphi 0, %s136
    %s158 = sphi 0, %s160
    %s161 = sphi 0, %s158
    %s162 = sphi 0, %s161
    %s178 = sphi 0, %s162
    %s184 = sphi 0, %s186
    %s187 = sphi 0, %s184
    %s188 = sphi 0, %s187
    %s204 = sphi 0, %s188
    %s210 = sphi 0, %s212
    %s213 = sphi 0, %s210
    %s214 = sphi 0, %s213
    %s230 = sphi 0, %s214
    %s236 = sphi 0, %s238
    %s239 = sphi 0, %s236
    %s240 = sphi 0, %s239
    %s256 = sphi 0, %s240
    %s262 = sphi 0, %s264
    %s265 = sphi 0, %s262
    %s266 = sphi 0, %s265
    %s282 = sphi 0, %s266
    %s288 = sphi 0, %s290
    %s291 = sphi 0, %s288
    %s292 = sphi 0, %s291
    %s308 = sphi 0, %s292
    %s314 = sphi 0, %s316
    %s317 = sphi 0, %s314
    %s318 = sphi 0, %s317
    %s334 = sphi 0, %s318
  $region4: #{dereverb_loss.3} parent=0 // loop_header_branch
    %21 = sbr.rel (%p19) target = $region8
  $region5: #{dereverb_loss.3} parent=0 // loop_body
    %s23 = ssub.s32 %s18, 1
    %s24 = ssub.s32 %s18, 2
    %s25 = sadd.s32 %s18, 1
    %s26 = ssub.s32 %s18, %s25
    %p27 = scmp.eq.s32.totalorder %s26, 0
    %s29 = sadd.s32 %s28, 1
    %s30 = scalar_select %p27, %s28, %s29
    %p33 = pneg %p27
    %p34 = scmp.eq.s32.totalorder %s18, 1
    %p35 = por %p33, %p34
    %p36 = scmp.ne.s32.totalorder %s28, %s31
    %p37 = scmp.eq.s32.totalorder %s18, 0
    %p38 = por %p36, %p37
    %p39 = scmp.ne.s32.totalorder %s28, %s31
    %p40 = scmp.eq.s32.totalorder %s23, 1
    %p41 = por %p39, %p40
    %p42 = scmp.ne.s32.totalorder %s31, %s32
    %p43 = scmp.eq.s32.totalorder %s23, 0
    %p44 = por %p42, %p43
    %p45 = scmp.ne.s32.totalorder %s31, %s32
    %p46 = scmp.eq.s32.totalorder %s24, 1
    %p47 = por %p45, %p46
    %p49 = scmp.ne.s32.totalorder %s32, %s48
    %p50 = scmp.eq.s32.totalorder %s24, 0
    %p51 = por %p49, %p50
    %s52 = ssub.s32 %s18, %s25
    %p53 = scmp.eq.s32.totalorder %s52, 0
    %s55 = sadd.s32 %s54, 1
    %s56 = scalar_select %p53, %s54, %s55
    %p59 = pneg %p53
    %p60 = scmp.eq.s32.totalorder %s18, 1
    %p61 = por %p59, %p60
    %p62 = scmp.ne.s32.totalorder %s54, %s57
    %p63 = scmp.eq.s32.totalorder %s18, 0
    %p64 = por %p62, %p63
    %p65 = scmp.ne.s32.totalorder %s54, %s57
    %p66 = scmp.eq.s32.totalorder %s23, 1
    %p67 = por %p65, %p66
    %p68 = scmp.ne.s32.totalorder %s57, %s58
    %p69 = scmp.eq.s32.totalorder %s23, 0
    %p70 = por %p68, %p69
    %p71 = scmp.ne.s32.totalorder %s57, %s58
    %p72 = scmp.eq.s32.totalorder %s24, 1
    %p73 = por %p71, %p72
    %p75 = scmp.ne.s32.totalorder %s58, %s74
    %p76 = scmp.eq.s32.totalorder %s24, 0
    %p77 = por %p75, %p76
    %s78 = ssub.s32 %s18, %s25
    %p79 = scmp.eq.s32.totalorder %s78, 0
    %s81 = sadd.s32 %s80, 1
    %s82 = scalar_select %p79, %s80, %s81
    %p85 = pneg %p79
    %p86 = scmp.eq.s32.totalorder %s18, 1
    %p87 = por %p85, %p86
    %p88 = scmp.ne.s32.totalorder %s80, %s83
    %p89 = scmp.eq.s32.totalorder %s18, 0
    %p90 = por %p88, %p89
    %p91 = scmp.ne.s32.totalorder %s80, %s83
    %p92 = scmp.eq.s32.totalorder %s23, 1
    %p93 = por %p91, %p92
    %p94 = scmp.ne.s32.totalorder %s83, %s84
    %p95 = scmp.eq.s32.totalorder %s23, 0
    %p96 = por %p94, %p95
    %p97 = scmp.ne.s32.totalorder %s83, %s84
    %p98 = scmp.eq.s32.totalorder %s24, 1
    %p99 = por %p97, %p98
    %p101 = scmp.ne.s32.totalorder %s84, %s100
    %p102 = scmp.eq.s32.totalorder %s24, 0
    %p103 = por %p101, %p102
    %s104 = ssub.s32 %s18, %s25
    %p105 = scmp.eq.s32.totalorder %s104, 0
    %s107 = sadd.s32 %s106, 1
    %s108 = scalar_select %p105, %s106, %s107
    %p111 = pneg %p105
    %p112 = scmp.eq.s32.totalorder %s18, 1
    %p113 = por %p111, %p112
    %p114 = scmp.ne.s32.totalorder %s106, %s109
    %p115 = scmp.eq.s32.totalorder %s18, 0
    %p116 = por %p114, %p115
    %p117 = scmp.ne.s32.totalorder %s106, %s109
    %p118 = scmp.eq.s32.totalorder %s23, 1
    %p119 = por %p117, %p118
    %p120 = scmp.ne.s32.totalorder %s109, %s110
    %p121 = scmp.eq.s32.totalorder %s23, 0
    %p122 = por %p120, %p121
    %p123 = scmp.ne.s32.totalorder %s109, %s110
    %p124 = scmp.eq.s32.totalorder %s24, 1
    %p125 = por %p123, %p124
    %p127 = scmp.ne.s32.totalorder %s110, %s126
    %p128 = scmp.eq.s32.totalorder %s24, 0
    %p129 = por %p127, %p128
    %s130 = ssub.s32 %s18, %s25
    %p131 = scmp.eq.s32.totalorder %s130, 0
    %s133 = sadd.s32 %s132, 1
    %s134 = scalar_select %p131, %s132, %s133
    %p137 = pneg %p131
    %p138 = scmp.eq.s32.totalorder %s18, 1
    %p139 = por %p137, %p138
    %p140 = scmp.ne.s32.totalorder %s132, %s135
    %p141 = scmp.eq.s32.totalorder %s18, 0
    %p142 = por %p140, %p141
    %p143 = scmp.ne.s32.totalorder %s132, %s135
    %p144 = scmp.eq.s32.totalorder %s23, 1
    %p145 = por %p143, %p144
    %p146 = scmp.ne.s32.totalorder %s135, %s136
    %p147 = scmp.eq.s32.totalorder %s23, 0
    %p148 = por %p146, %p147
    %p149 = scmp.ne.s32.totalorder %s135, %s136
    %p150 = scmp.eq.s32.totalorder %s24, 1
    %p151 = por %p149, %p150
    %p153 = scmp.ne.s32.totalorder %s136, %s152
    %p154 = scmp.eq.s32.totalorder %s24, 0
    %p155 = por %p153, %p154
    %s156 = ssub.s32 %s18, %s25
    %p157 = scmp.eq.s32.totalorder %s156, 0
    %s159 = sadd.s32 %s158, 1
    %s160 = scalar_select %p157, %s158, %s159
    %p163 = pneg %p157
    %p164 = scmp.eq.s32.totalorder %s18, 1
    %p165 = por %p163, %p164
    %p166 = scmp.ne.s32.totalorder %s158, %s161
    %p167 = scmp.eq.s32.totalorder %s18, 0
    %p168 = por %p166, %p167
    %p169 = scmp.ne.s32.totalorder %s158, %s161
    %p170 = scmp.eq.s32.totalorder %s23, 1
    %p171 = por %p169, %p170
    %p172 = scmp.ne.s32.totalorder %s161, %s162
    %p173 = scmp.eq.s32.totalorder %s23, 0
    %p174 = por %p172, %p173
    %p175 = scmp.ne.s32.totalorder %s161, %s162
    %p176 = scmp.eq.s32.totalorder %s24, 1
    %p177 = por %p175, %p176
    %p179 = scmp.ne.s32.totalorder %s162, %s178
    %p180 = scmp.eq.s32.totalorder %s24, 0
    %p181 = por %p179, %p180
    %s182 = ssub.s32 %s18, %s25
    %p183 = scmp.eq.s32.totalorder %s182, 0
    %s185 = sadd.s32 %s184, 1
    %s186 = scalar_select %p183, %s184, %s185
    %p189 = pneg %p183
    %p190 = scmp.eq.s32.totalorder %s18, 1
    %p191 = por %p189, %p190
    %p192 = scmp.ne.s32.totalorder %s184, %s187
    %p193 = scmp.eq.s32.totalorder %s18, 0
    %p194 = por %p192, %p193
    %p195 = scmp.ne.s32.totalorder %s184, %s187
    %p196 = scmp.eq.s32.totalorder %s23, 1
    %p197 = por %p195, %p196
    %p198 = scmp.ne.s32.totalorder %s187, %s188
    %p199 = scmp.eq.s32.totalorder %s23, 0
    %p200 = por %p198, %p199
    %p201 = scmp.ne.s32.totalorder %s187, %s188
    %p202 = scmp.eq.s32.totalorder %s24, 1
    %p203 = por %p201, %p202
    %p205 = scmp.ne.s32.totalorder %s188, %s204
    %p206 = scmp.eq.s32.totalorder %s24, 0
    %p207 = por %p205, %p206
    %s208 = ssub.s32 %s18, %s25
    %p209 = scmp.eq.s32.totalorder %s208, 0
    %s211 = sadd.s32 %s210, 1
    %s212 = scalar_select %p209, %s210, %s211
    %p215 = pneg %p209
    %p216 = scmp.eq.s32.totalorder %s18, 1
    %p217 = por %p215, %p216
    %p218 = scmp.ne.s32.totalorder %s210, %s213
    %p219 = scmp.eq.s32.totalorder %s18, 0
    %p220 = por %p218, %p219
    %p221 = scmp.ne.s32.totalorder %s210, %s213
    %p222 = scmp.eq.s32.totalorder %s23, 1
    %p223 = por %p221, %p222
    %p224 = scmp.ne.s32.totalorder %s213, %s214
    %p225 = scmp.eq.s32.totalorder %s23, 0
    %p226 = por %p224, %p225
    %p227 = scmp.ne.s32.totalorder %s213, %s214
    %p228 = scmp.eq.s32.totalorder %s24, 1
    %p229 = por %p227, %p228
    %p231 = scmp.ne.s32.totalorder %s214, %s230
    %p232 = scmp.eq.s32.totalorder %s24, 0
    %p233 = por %p231, %p232
    %s234 = ssub.s32 %s18, %s25
    %p235 = scmp.eq.s32.totalorder %s234, 0
    %s237 = sadd.s32 %s236, 1
    %s238 = scalar_select %p235, %s236, %s237
    %p241 = pneg %p235
    %p242 = scmp.eq.s32.totalorder %s18, 1
    %p243 = por %p241, %p242
    %p244 = scmp.ne.s32.totalorder %s236, %s239
    %p245 = scmp.eq.s32.totalorder %s18, 0
    %p246 = por %p244, %p245
    %p247 = scmp.ne.s32.totalorder %s236, %s239
    %p248 = scmp.eq.s32.totalorder %s23, 1
    %p249 = por %p247, %p248
    %p250 = scmp.ne.s32.totalorder %s239, %s240
    %p251 = scmp.eq.s32.totalorder %s23, 0
    %p252 = por %p250, %p251
    %p253 = scmp.ne.s32.totalorder %s239, %s240
    %p254 = scmp.eq.s32.totalorder %s24, 1
    %p255 = por %p253, %p254
    %p257 = scmp.ne.s32.totalorder %s240, %s256
    %p258 = scmp.eq.s32.totalorder %s24, 0
    %p259 = por %p257, %p258
    %s260 = ssub.s32 %s18, %s25
    %p261 = scmp.eq.s32.totalorder %s260, 0
    %s263 = sadd.s32 %s262, 1
    %s264 = scalar_select %p261, %s262, %s263
    %p267 = pneg %p261
    %p268 = scmp.eq.s32.totalorder %s18, 1
    %p269 = por %p267, %p268
    %p270 = scmp.ne.s32.totalorder %s262, %s265
    %p271 = scmp.eq.s32.totalorder %s18, 0
    %p272 = por %p270, %p271
    %p273 = scmp.ne.s32.totalorder %s262, %s265
    %p274 = scmp.eq.s32.totalorder %s23, 1
    %p275 = por %p273, %p274
    %p276 = scmp.ne.s32.totalorder %s265, %s266
    %p277 = scmp.eq.s32.totalorder %s23, 0
    %p278 = por %p276, %p277
    %p279 = scmp.ne.s32.totalorder %s265, %s266
    %p280 = scmp.eq.s32.totalorder %s24, 1
    %p281 = por %p279, %p280
    %p283 = scmp.ne.s32.totalorder %s266, %s282
    %p284 = scmp.eq.s32.totalorder %s24, 0
    %p285 = por %p283, %p284
    %s286 = ssub.s32 %s18, %s25
    %p287 = scmp.eq.s32.totalorder %s286, 0
    %s289 = sadd.s32 %s288, 1
    %s290 = scalar_select %p287, %s288, %s289
    %p293 = pneg %p287
    %p294 = scmp.eq.s32.totalorder %s18, 1
    %p295 = por %p293, %p294
    %p296 = scmp.ne.s32.totalorder %s288, %s291
    %p297 = scmp.eq.s32.totalorder %s18, 0
    %p298 = por %p296, %p297
    %p299 = scmp.ne.s32.totalorder %s288, %s291
    %p300 = scmp.eq.s32.totalorder %s23, 1
    %p301 = por %p299, %p300
    %p302 = scmp.ne.s32.totalorder %s291, %s292
    %p303 = scmp.eq.s32.totalorder %s23, 0
    %p304 = por %p302, %p303
    %p305 = scmp.ne.s32.totalorder %s291, %s292
    %p306 = scmp.eq.s32.totalorder %s24, 1
    %p307 = por %p305, %p306
    %p309 = scmp.ne.s32.totalorder %s292, %s308
    %p310 = scmp.eq.s32.totalorder %s24, 0
    %p311 = por %p309, %p310
    %s312 = ssub.s32 %s18, %s25
    %p313 = scmp.eq.s32.totalorder %s312, 0
    %s315 = sadd.s32 %s314, 1
    %s316 = scalar_select %p313, %s314, %s315
    %p319 = pneg %p313
    %p320 = scmp.eq.s32.totalorder %s18, 1
    %p321 = por %p319, %p320
    %p322 = scmp.ne.s32.totalorder %s314, %s317
    %p323 = scmp.eq.s32.totalorder %s18, 0
    %p324 = por %p322, %p323
    %p325 = scmp.ne.s32.totalorder %s314, %s317
    %p326 = scmp.eq.s32.totalorder %s23, 1
    %p327 = por %p325, %p326
    %p328 = scmp.ne.s32.totalorder %s317, %s318
    %p329 = scmp.eq.s32.totalorder %s23, 0
    %p330 = por %p328, %p329
    %p331 = scmp.ne.s32.totalorder %s317, %s318
    %p332 = scmp.eq.s32.totalorder %s24, 1
    %p333 = por %p331, %p332
    %p335 = scmp.ne.s32.totalorder %s318, %s334
    %p336 = scmp.eq.s32.totalorder %s24, 0
    %p337 = por %p335, %p336
    %p338 = scmp.le.s32.totalorder 1, %s18
    %p339 = scmp.lt.s32.totalorder %s18, 3
    %p340 = pnand %p338, %p339
    %p341 = pneg %p340
    // Predicated region
    $region9: #{dereverb_loss.3} parent=5 // pred_check
      _
    $region10: #{dereverb_loss.3} parent=5 // pred_check_branch
      %343 = sbr.rel (%p340) target = $region12
    $region11: #{dereverb_loss.3} parent=5 // pred_region
      %s344 = ssub.s32 %s18, 1
    $region12: #{dereverb_loss.3} parent=5 // pred_fallthru
      _
    %p345 = scmp.lt.s32.totalorder %s18, 2
    // Predicated region
    $region13: #{dereverb_loss.3} parent=5 // pred_check
      %p346 = pneg %p345
    $region14: #{dereverb_loss.3} parent=5 // pred_check_branch
      %348 = sbr.rel (%p346) target = $region16
    $region15: #{dereverb_loss.3} parent=5 // pred_region
      // Predicated region
      $region17: #{dereverb_loss.3} parent=15 // pred_check
        %p349 = pneg %p38
      $region18: #{dereverb_loss.3} parent=15 // pred_check_branch
        %351 = sbr.rel (%p349) target = $region20
      $region19: #{dereverb_loss.3} parent=15 // pred_region
        %p352 = scmp.lt.s32.totalorder %s18, 1
        %s353 = scalar_select %p352, %s18, 1
        %s354 = smul.addr %s353, 2
        %s355 = smul.addr %s354, 2
        %s356 = scalar_lea.vmem %s0, %s355
      $region20: #{dereverb_loss.3} parent=15 // pred_fallthru
        _
      // Predicated region
      $region21: #{dereverb_loss.3} parent=15 // pred_check
        %p357 = pneg %p64
      $region22: #{dereverb_loss.3} parent=15 // pred_check_branch
        %359 = sbr.rel (%p357) target = $region24
      $region23: #{dereverb_loss.3} parent=15 // pred_region
        %p360 = scmp.lt.s32.totalorder %s18, 1
        %s361 = scalar_select %p360, %s18, 1
        %s362 = smul.addr %s361, 32
        %s363 = smul.addr %s362, 8
        %s364 = scalar_lea.vmem %s1, %s363
      $region24: #{dereverb_loss.3} parent=15 // pred_fallthru
        _
      // Predicated region
      $region25: #{dereverb_loss.3} parent=15 // pred_check
        %p365 = pneg %p90
      $region26: #{dereverb_loss.3} parent=15 // pred_check_branch
        %367 = sbr.rel (%p365) target = $region28
      $region27: #{dereverb_loss.3} parent=15 // pred_region
        %p368 = scmp.lt.s32.totalorder %s18, 1
        %s369 = scalar_select %p368, %s18, 1
        %s370 = smul.addr %s369, 2
        %s371 = scalar_lea.vmem %s2, %s370
      $region28: #{dereverb_loss.3} parent=15 // pred_fallthru
        _
      // Predicated region
      $region29: #{dereverb_loss.3} parent=15 // pred_check
        %p372 = pneg %p116
      $region30: #{dereverb_loss.3} parent=15 // pred_check_branch
        %374 = sbr.rel (%p372) target = $region32
      $region31: #{dereverb_loss.3} parent=15 // pred_region
        %p375 = scmp.lt.s32.totalorder %s18, 1
        %s376 = scalar_select %p375, %s18, 1
        %s377 = smul.addr %s376, 2
        %s378 = scalar_lea.vmem %s3, %s377
      $region32: #{dereverb_loss.3} parent=15 // pred_fallthru
        _
      // Predicated region
      $region33: #{dereverb_loss.3} parent=15 // pred_check
        %p379 = pneg %p142
      $region34: #{dereverb_loss.3} parent=15 // pred_check_branch
        %381 = sbr.rel (%p379) target = $region36
      $region35: #{dereverb_loss.3} parent=15 // pred_region
        %p382 = scmp.lt.s32.totalorder %s18, 1
        %s383 = scalar_select %p382, %s18, 1
        %s384 = smul.addr %s383, 2
        %s385 = scalar_lea.vmem %s4, %s384
      $region36: #{dereverb_loss.3} parent=15 // pred_fallthru
        _
      // Predicated region
      $region37: #{dereverb_loss.3} parent=15 // pred_check
        %p386 = pneg %p168
      $region38: #{dereverb_loss.3} parent=15 // pred_check_branch
        %388 = sbr.rel (%p386) target = $region40
      $region39: #{dereverb_loss.3} parent=15 // pred_region
        %p389 = scmp.lt.s32.totalorder %s18, 1
        %s390 = scalar_select %p389, %s18, 1
        %s391 = smul.addr %s390, 2
        %s392 = scalar_lea.vmem %s5, %s391
      $region40: #{dereverb_loss.3} parent=15 // pred_fallthru
        _
      // Predicated region
      $region41: #{dereverb_loss.3} parent=15 // pred_check
        %p393 = pneg %p194
      $region42: #{dereverb_loss.3} parent=15 // pred_check_branch
        %395 = sbr.rel (%p393) target = $region44
      $region43: #{dereverb_loss.3} parent=15 // pred_region
        %p396 = scmp.lt.s32.totalorder %s18, 1
        %s397 = scalar_select %p396, %s18, 1
        %s398 = smul.addr %s397, 4
        %s399 = scalar_lea.vmem %s6, %s398
      $region44: #{dereverb_loss.3} parent=15 // pred_fallthru
        _
    $region16: #{dereverb_loss.3} parent=5 // pred_fallthru
      _
    %p400 = scmp.le.s32.totalorder 1, %s18
    %p401 = scmp.lt.s32.totalorder %s18, 3
    %p402 = pnand %p400, %p401
    %p403 = pneg %p402
    // Predicated region
    $region45: #{dereverb_loss.3} parent=5 // pred_check
      _
    $region46: #{dereverb_loss.3} parent=5 // pred_check_branch
      %405 = sbr.rel (%p402) target = $region48
    $region47: #{dereverb_loss.3} parent=5 // pred_region
      %s406 = ssub.s32 %s18, 1
      %p407 = scmp.lt.s32.totalorder %s23, 1
      %s408 = scalar_select %p407, %s23, 1
      %s409 = smul.addr %s408, 2
      %s410 = smul.addr %s409, 2
      %s411 = scalar_lea.vmem %s0, %s410
      %p412 = pneg %p44
      %p413 = pneg %p41
      %p414 = scmp.lt.s32.totalorder %s23, 1
      %s415 = scalar_select %p414, %s23, 1
      %s416 = smul.addr %s415, 32
      %s417 = smul.addr %s416, 8
      %s418 = scalar_lea.vmem %s1, %s417
      %p419 = pneg %p70
      %p420 = pneg %p67
      %p421 = scmp.lt.s32.totalorder %s23, 1
      %s422 = scalar_select %p421, %s23, 1
      %s423 = smul.addr %s422, 2
      %s424 = scalar_lea.vmem %s2, %s423
      %p425 = pneg %p96
      %p426 = pneg %p93
      %p427 = scmp.lt.s32.totalorder %s23, 1
      %s428 = scalar_select %p427, %s23, 1
      %s429 = smul.addr %s428, 2
      %s430 = scalar_lea.vmem %s3, %s429
      %p431 = pneg %p122
      %p432 = pneg %p119
      %p433 = scmp.lt.s32.totalorder %s23, 1
      %s434 = scalar_select %p433, %s23, 1
      %s435 = smul.addr %s434, 2
      %s436 = scalar_lea.vmem %s4, %s435
      %p437 = pneg %p148
      %p438 = pneg %p145
      %p439 = scmp.lt.s32.totalorder %s23, 1
      %s440 = scalar_select %p439, %s23, 1
      %s441 = smul.addr %s440, 2
      %s442 = scalar_lea.vmem %s5, %s441
      %p443 = pneg %p174
      %p444 = pneg %p171
      %p445 = scmp.lt.s32.totalorder %s23, 1
      %s446 = scalar_select %p445, %s23, 1
      %s447 = smul.addr %s446, 4
      %s448 = scalar_lea.vmem %s6, %s447
      %p449 = pneg %p200
      %p450 = pneg %p197
      %p451 = pneg %p226
      %p452 = pneg %p223
      %p453 = scmp.lt.s32.totalorder %s23, 1
      %s454 = scalar_select %p453, %s23, 1
      %s455 = scalar_lea.vmem %s7, %s454
      %p456 = pneg %p252
      %p457 = pneg %p249
      %p458 = scmp.lt.s32.totalorder %s23, 1
      %s459 = scalar_select %p458, %s23, 1
      %s460 = scalar_lea.vmem %s8, %s459
      %p461 = pneg %p278
      %p462 = pneg %p275
      %p463 = scmp.lt.s32.totalorder %s23, 1
      %s464 = scalar_select %p463, %s23, 1
      %s465 = scalar_lea.vmem %s9, %s464
      %p466 = pneg %p304
      %p467 = pneg %p301
      %p468 = scmp.lt.s32.totalorder %s23, 1
      %s469 = scalar_select %p468, %s23, 1
      %s470 = scalar_lea.vmem %s10, %s469
      %p471 = pneg %p330
      %p472 = pneg %p327
      %p473 = scmp.lt.s32.totalorder %s23, 1
      %s474 = scalar_select %p473, %s23, 1
      %s475 = smul.addr %s474, 4
      %s476 = scalar_lea.vmem %s11, %s475
      %p477 = scmp.lt.s32.totalorder %s23, 1
      %s478 = scalar_select %p477, %s23, 1
      %s479 = smul.addr %s478, 2
      %s480 = smul.addr %s479, 2
      %s481 = scalar_lea.vmem %s0, %s480
      %p482 = scmp.lt.s32.totalorder %s23, 1
      %s483 = scalar_select %p482, %s23, 1
      %s484 = smul.addr %s483, 32
      %s485 = smul.addr %s484, 8
      %s486 = scalar_lea.vmem %s1, %s485
      %p487 = scmp.lt.s32.totalorder %s23, 1
      %s488 = scalar_select %p487, %s23, 1
      %s489 = smul.addr %s488, 2
      %s490 = scalar_lea.vmem %s2, %s489
      %p491 = scmp.lt.s32.totalorder %s23, 1
      %s492 = scalar_select %p491, %s23, 1
      %s493 = smul.addr %s492, 2
      %s494 = scalar_lea.vmem %s3, %s493
      %p495 = scmp.lt.s32.totalorder %s23, 1
      %s496 = scalar_select %p495, %s23, 1
      %s497 = smul.addr %s496, 2
      %s498 = scalar_lea.vmem %s4, %s497
      %p499 = scmp.lt.s32.totalorder %s23, 1
      %s500 = scalar_select %p499, %s23, 1
      %s501 = smul.addr %s500, 2
      %s502 = scalar_lea.vmem %s5, %s501
      %p503 = scmp.lt.s32.totalorder %s23, 1
      %s504 = scalar_select %p503, %s23, 1
      %s505 = smul.addr %s504, 4
      %s506 = scalar_lea.vmem %s6, %s505
      %p507 = scmp.lt.s32.totalorder %s23, 1
      %s508 = scalar_select %p507, %s23, 1
      %s509 = scalar_lea.vmem %s7, %s508
      %p510 = scmp.lt.s32.totalorder %s23, 1
      %s511 = scalar_select %p510, %s23, 1
      %s512 = scalar_lea.vmem %s8, %s511
      %p513 = scmp.lt.s32.totalorder %s23, 1
      %s514 = scalar_select %p513, %s23, 1
      %s515 = scalar_lea.vmem %s9, %s514
      %p516 = scmp.lt.s32.totalorder %s23, 1
      %s517 = scalar_select %p516, %s23, 1
      %s518 = scalar_lea.vmem %s10, %s517
      %p519 = scmp.lt.s32.totalorder %s23, 1
      %s520 = scalar_select %p519, %s23, 1
      %s521 = smul.addr %s520, 4
      %s522 = scalar_lea.vmem %s11, %s521
      %v523 = vld [vmem:[%s481] sm:$0xf]
      %v524 = vld [vmem:[%s490] sm:$0x3]
      %v525 = vld [vmem:[%s494] sm:$0x3]
      %v526 = vld [vmem:[%s498] sm:$0x3]
      %v527 = vld [vmem:[%s502] sm:$0x3]
      %v528 = vsub.f32 %v523, %v525
      %v529 = vand.u32 2147483647, %v528
      %vm530 = vcmask 1041408
      %v531 = vsel %vm530, %v529, 0.0
      %532 = vadd.xlane.f32.xlu0 %v531
      %v533 = vpop.xlane.xlu0 %532
      %v534 = vrot.slane %v533, 4
      %v535 = vadd.f32 %v533, %v534
      %v536 = vrot.slane %v535, 2
      %v537 = vadd.f32 %v535, %v536
      %v538 = vrot.slane %v537, 1
      %v539 = vadd.f32 %v537, %v538
      %s540 = vtos %v539
      %v541 = vstv %s540
      %vm542 = vcmask 0
      %543 = vst.msk [vmem:[%s512] sm:$0x1] %vm542, %v541
      %v544 = vsub.f32 %v524, %v526
      %v545 = vand.u32 2147483647, %v544
      %v546 = vsel %vm530, %v545, 0.0
      %547 = vadd.xlane.f32.xlu0 %v546
      %v548 = vpop.xlane.xlu0 %547
      %v549 = vrot.slane %v548, 4
      %v550 = vadd.f32 %v548, %v549
      %v551 = vrot.slane %v550, 2
      %v552 = vadd.f32 %v550, %v551
      %v553 = vrot.slane %v552, 1
      %v554 = vadd.f32 %v552, %v553
      %s555 = vtos %v554
      %v556 = vstv %s555
      %557 = vst.msk [vmem:[%s515] sm:$0x1] %vm542, %v556
      %v558 = vand.u32 2147483647, %v524
      %v559 = vsel %vm530, %v558, 0.0
      %560 = vadd.xlane.f32.xlu0 %v559
      %v561 = vpop.xlane.xlu0 %560
      %v562 = vrot.slane %v561, 4
      %v563 = vadd.f32 %v561, %v562
      %v564 = vrot.slane %v563, 2
      %v565 = vadd.f32 %v563, %v564
      %v566 = vrot.slane %v565, 1
      %v567 = vadd.f32 %v565, %v566
      %s568 = vtos %v567
      %v569 = vstv %s568
      %570 = vst.msk [vmem:[%s518] sm:$0x1] %vm542, %v569
      %v571 = vld [vmem:[%s506] sm:$0xf]
      %v572 = vmul.f32 %v571, %v571
      %vm573 = vcmask 519168
      %v574 = vsel %vm573, %v572, 0.0
      %575 = vadd.xlane.f32.xlu0 %v574
      %v576 = vpop.xlane.xlu0 %575
      %vm577 = vcmask 3072
      %578 = vst.msk [vmem:[%s522] sm:$0xf] %vm577, %v576
      %v579 = vld [vmem:[%s486] sm:$0xff]
      %v580 = vld [vmem:[%s486 + $0x8] sm:$0xff]
      %v581 = vld [vmem:[%s486 + $0x10] sm:$0xff]
      %v582 = vld [vmem:[%s486 + $0x18] sm:$0xff]
      %v583 = vld [vmem:[%s486 + $0x20] sm:$0xff]
      %v584 = vld [vmem:[%s486 + $0x28] sm:$0xff]
      %v585 = vld [vmem:[%s486 + $0x30] sm:$0xff]
      %v586 = vld [vmem:[%s486 + $0x38] sm:$0xff]
      %v587 = vld [vmem:[%s486 + $0x40] sm:$0xff]
      %v588 = vld [vmem:[%s486 + $0x48] sm:$0xff]
      %v589 = vld [vmem:[%s486 + $0x50] sm:$0xff]
      %v590 = vld [vmem:[%s486 + $0x58] sm:$0xff]
      %v591 = vld [vmem:[%s486 + $0x60] sm:$0xff]
      %v592 = vld [vmem:[%s486 + $0x68] sm:$0xff]
      %v593 = vld [vmem:[%s486 + $0x70] sm:$0xff]
      %v594 = vld [vmem:[%s486 + $0x78] sm:$0xff]
      %v595 = vld [vmem:[%s486 + $0x80] sm:$0xff]
      %v596 = vld [vmem:[%s486 + $0x88] sm:$0xff]
      %v597 = vld [vmem:[%s486 + $0x90] sm:$0xff]
      %v598 = vld [vmem:[%s486 + $0x98] sm:$0xff]
      %v599 = vld [vmem:[%s486 + $0xa0] sm:$0xff]
      %v600 = vld [vmem:[%s486 + $0xa8] sm:$0xff]
      %v601 = vld [vmem:[%s486 + $0xb0] sm:$0xff]
      %v602 = vld [vmem:[%s486 + $0xb8] sm:$0xff]
      %v603 = vld [vmem:[%s486 + $0xc0] sm:$0xff]
      %v604 = vld [vmem:[%s486 + $0xc8] sm:$0xff]
      %v605 = vld [vmem:[%s486 + $0xd0] sm:$0xff]
      %v606 = vld [vmem:[%s486 + $0xd8] sm:$0xff]
      %v607 = vld [vmem:[%s486 + $0xe0] sm:$0xff]
      %v608 = vld [vmem:[%s486 + $0xe8] sm:$0xff]
      %v609 = vld [vmem:[%s486 + $0xf0] sm:$0xff]
      %v610 = vld [vmem:[%s486 + $0xf8] sm:$0xff]
      %612 = vst [vmem:[#allocation1] ss:$4 sm:$0xff] %v523
      %v613 = vld.sshfl [vmem:[#allocation1] sm:$0xff pattern:$0x73625140]
      %v614 = vld.sshfl [vmem:[#allocation1 + $0x8] sm:$0xff pattern:$0x73625140]
      %617 = vmatpush.msra.mxu0 %v594
      %618 = vmatpush.msra.mxu0 %v593
      %619 = vmatpush.msra.mxu0 %v592
      %620 = vmatpush.msra.mxu0 %v591
      %621 = vmatpush.msra.mxu0 %v590
      %622 = vmatpush.msra.mxu0 %v589
      %623 = vmatpush.msra.mxu0 %v588
      %624 = vmatpush.msra.mxu0 %v587
      %625 = vmatpush.msra.mxu0 %v586
      %626 = vmatpush.msra.mxu0 %v585
      %627 = vmatpush.msra.mxu0 %v584
      %628 = vmatpush.msra.mxu0 %v583
      %629 = vmatpush.msra.mxu0 %v582
      %630 = vmatpush.msra.mxu0 %v581
      %631 = vmatpush.msra.mxu0 %v580
      %632 = vmatpush.msra.mxu0 %v579
      %633 = vmatmul.f32.gmra.mxu0 %v613
      %v634 = vpop.f32.mrf.mxu0
      %v635 = vadd.f32 0.0, %v634
      %636 = vdwg.mxu0
      %637 = vmatpush.msra.mxu0 %v610
      %638 = vmatpush.msra.mxu0 %v609
      %639 = vmatpush.msra.mxu0 %v608
      %640 = vmatpush.msra.mxu0 %v607
      %641 = vmatpush.msra.mxu0 %v606
      %642 = vmatpush.msra.mxu0 %v605
      %643 = vmatpush.msra.mxu0 %v604
      %644 = vmatpush.msra.mxu0 %v603
      %645 = vmatpush.msra.mxu0 %v602
      %646 = vmatpush.msra.mxu0 %v601
      %647 = vmatpush.msra.mxu0 %v600
      %648 = vmatpush.msra.mxu0 %v599
      %649 = vmatpush.msra.mxu0 %v598
      %650 = vmatpush.msra.mxu0 %v597
      %651 = vmatpush.msra.mxu0 %v596
      %652 = vmatpush.msra.mxu0 %v595
      %653 = vmatmul.f32.gmra.mxu0 %v614
      %v654 = vpop.f32.mrf.mxu0
      %v655 = vadd.f32 %v635, %v654
      %656 = vdwg.mxu0
      %v657 = vsub.f32 %v655, %v527
      %v658 = vand.u32 2147483647, %v657
      %v659 = vsel %vm530, %v658, 0.0
      %660 = vadd.xlane.f32.xlu0 %v659
      %v661 = vpop.xlane.xlu0 %660
      %v662 = vrot.slane %v661, 4
      %v663 = vadd.f32 %v661, %v662
      %v664 = vrot.slane %v663, 2
      %v665 = vadd.f32 %v663, %v664
      %v666 = vrot.slane %v665, 1
      %v667 = vadd.f32 %v665, %v666
      %s668 = vtos %v667
      %v669 = vstv %s668
      %670 = vst.msk [vmem:[%s509] sm:$0x1] %vm542, %v669
      %p671 = scmp.lt.s32.totalorder %s23, 1
      %s672 = scalar_select %p671, %s23, 1
      %s673 = scalar_lea.vmem %s7, %s672
      %p674 = scmp.lt.s32.totalorder %s23, 1
      %s675 = scalar_select %p674, %s23, 1
      %s676 = scalar_lea.vmem %s8, %s675
      %p677 = scmp.lt.s32.totalorder %s23, 1
      %s678 = scalar_select %p677, %s23, 1
      %s679 = scalar_lea.vmem %s9, %s678
      %p680 = scmp.lt.s32.totalorder %s23, 1
      %s681 = scalar_select %p680, %s23, 1
      %s682 = scalar_lea.vmem %s10, %s681
      %p683 = scmp.lt.s32.totalorder %s23, 1
      %s684 = scalar_select %p683, %s23, 1
      %s685 = smul.addr %s684, 4
      %s686 = scalar_lea.vmem %s11, %s685
      // Predicated region
      $region49: #{dereverb_loss.3} parent=47 // pred_check
        %p687 = pneg %p223
      $region50: #{dereverb_loss.3} parent=47 // pred_check_branch
        %689 = sbr.rel (%p687) target = $region52
      $region51: #{dereverb_loss.3} parent=47 // pred_region
        _
      $region52: #{dereverb_loss.3} parent=47 // pred_fallthru
        _
      // Predicated region
      $region53: #{dereverb_loss.3} parent=47 // pred_check
        %p690 = pneg %p249
      $region54: #{dereverb_loss.3} parent=47 // pred_check_branch
        %692 = sbr.rel (%p690) target = $region56
      $region55: #{dereverb_loss.3} parent=47 // pred_region
        _
      $region56: #{dereverb_loss.3} parent=47 // pred_fallthru
        _
      // Predicated region
      $region57: #{dereverb_loss.3} parent=47 // pred_check
        %p693 = pneg %p275
      $region58: #{dereverb_loss.3} parent=47 // pred_check_branch
        %695 = sbr.rel (%p693) target = $region60
      $region59: #{dereverb_loss.3} parent=47 // pred_region
        _
      $region60: #{dereverb_loss.3} parent=47 // pred_fallthru
        _
      // Predicated region
      $region61: #{dereverb_loss.3} parent=47 // pred_check
        %p696 = pneg %p301
      $region62: #{dereverb_loss.3} parent=47 // pred_check_branch
        %698 = sbr.rel (%p696) target = $region64
      $region63: #{dereverb_loss.3} parent=47 // pred_region
        _
      $region64: #{dereverb_loss.3} parent=47 // pred_fallthru
        _
      // Predicated region
      $region65: #{dereverb_loss.3} parent=47 // pred_check
        %p699 = pneg %p327
      $region66: #{dereverb_loss.3} parent=47 // pred_check_branch
        %701 = sbr.rel (%p699) target = $region68
      $region67: #{dereverb_loss.3} parent=47 // pred_region
        _
      $region68: #{dereverb_loss.3} parent=47 // pred_fallthru
        _
    $region48: #{dereverb_loss.3} parent=5 // pred_fallthru
      _
    %p702 = scmp.le.s32.totalorder 2, %s18
    // Predicated region
    $region69: #{dereverb_loss.3} parent=5 // pred_check
      %p703 = pneg %p702
    $region70: #{dereverb_loss.3} parent=5 // pred_check_branch
      %705 = sbr.rel (%p703) target = $region72
    $region71: #{dereverb_loss.3} parent=5 // pred_region
      %s706 = ssub.s32 %s18, 2
      // Predicated region
      $region73: #{dereverb_loss.3} parent=71 // pred_check
        %p707 = pneg %p229
      $region74: #{dereverb_loss.3} parent=71 // pred_check_branch
        %709 = sbr.rel (%p707) target = $region76
      $region75: #{dereverb_loss.3} parent=71 // pred_region
        %p710 = scmp.lt.s32.totalorder %s24, 1
        %s711 = scalar_select %p710, %s24, 1
        %s712 = scalar_lea.vmem %s7, %s711
      $region76: #{dereverb_loss.3} parent=71 // pred_fallthru
        _
      // Predicated region
      $region77: #{dereverb_loss.3} parent=71 // pred_check
        %p713 = pneg %p255
      $region78: #{dereverb_loss.3} parent=71 // pred_check_branch
        %715 = sbr.rel (%p713) target = $region80
      $region79: #{dereverb_loss.3} parent=71 // pred_region
        %p716 = scmp.lt.s32.totalorder %s24, 1
        %s717 = scalar_select %p716, %s24, 1
        %s718 = scalar_lea.vmem %s8, %s717
      $region80: #{dereverb_loss.3} parent=71 // pred_fallthru
        _
      // Predicated region
      $region81: #{dereverb_loss.3} parent=71 // pred_check
        %p719 = pneg %p281
      $region82: #{dereverb_loss.3} parent=71 // pred_check_branch
        %721 = sbr.rel (%p719) target = $region84
      $region83: #{dereverb_loss.3} parent=71 // pred_region
        %p722 = scmp.lt.s32.totalorder %s24, 1
        %s723 = scalar_select %p722, %s24, 1
        %s724 = scalar_lea.vmem %s9, %s723
      $region84: #{dereverb_loss.3} parent=71 // pred_fallthru
        _
      // Predicated region
      $region85: #{dereverb_loss.3} parent=71 // pred_check
        %p725 = pneg %p307
      $region86: #{dereverb_loss.3} parent=71 // pred_check_branch
        %727 = sbr.rel (%p725) target = $region88
      $region87: #{dereverb_loss.3} parent=71 // pred_region
        %p728 = scmp.lt.s32.totalorder %s24, 1
        %s729 = scalar_select %p728, %s24, 1
        %s730 = scalar_lea.vmem %s10, %s729
      $region88: #{dereverb_loss.3} parent=71 // pred_fallthru
        _
      // Predicated region
      $region89: #{dereverb_loss.3} parent=71 // pred_check
        %p731 = pneg %p333
      $region90: #{dereverb_loss.3} parent=71 // pred_check_branch
        %733 = sbr.rel (%p731) target = $region92
      $region91: #{dereverb_loss.3} parent=71 // pred_region
        %p734 = scmp.lt.s32.totalorder %s24, 1
        %s735 = scalar_select %p734, %s24, 1
        %s736 = smul.addr %s735, 4
        %s737 = scalar_lea.vmem %s11, %s736
      $region92: #{dereverb_loss.3} parent=71 // pred_fallthru
        _
    $region72: #{dereverb_loss.3} parent=5 // pred_fallthru
      _
  $region6: #{dereverb_loss.3} parent=0 // loop_footer
    %s22 = sadd.s32 1, %s18
  $region7: #{dereverb_loss.3} parent=0 // loop_footer_branch
    %17 = sbr.rel target = $region3
  $region8: #{dereverb_loss.3} parent=0 // loop_exit
    _

// kernel: dereverb_loss.2
$region0: #{dereverb_loss.2}
  #allocation0 [shape = 'u32[]', space=smem, size = 0x4, offset = 0x4, fixed_abs, tag = 'smem constant byte address 0x4 - core index']
  #allocation1 [shape = 'u32[72,128]{1,0:T(1,128)}', space=vmem, size = 0x9000, scoped, tag = 'internal scratch']
  %s0 = inlined_call_operand.vmem [shape: f32[24,128], index: 0, kind: input, shape index: {}]
  %s1 = inlined_call_operand.vmem [shape: f32[24,128], index: 1, kind: input, shape index: {}]
  %s2 = inlined_call_operand.vmem [shape: f32[128,256], index: 2, kind: input, shape index: {}]
  %s3 = inlined_call_operand.vmem [shape: f32[128,128], index: 3, kind: input, shape index: {}]
  %s4 = inlined_call_operand.hbm [shape: f32[1,1,1], index: 4, kind: output, shape index: {0}]
  %s5 = inlined_call_operand.hbm [shape: f32[1,1,1], index: 5, kind: output, shape index: {1}]
  %s6 = inlined_call_operand.hbm [shape: f32[1,1,1], index: 6, kind: output, shape index: {2}]
  %7 = xla_tuple %s4, %s5, %s6
  %s8 = sld [smem:[#allocation0]]
  $region42: #{dereverb_loss.2} parent=0
    _
  %s10 = ssub.s32 1, %s8
  %s11 = scalar_select 0, %s10, %s8
  $region1: #{dereverb_loss.2} parent=0
    #allocation2 [shape = 'u8[512]{0}', space=vmem, size = 0x400, scoped, tag = 'output window, operand 0, single buffered']
    #allocation3 [shape = 's32[1]{0}', space=sflag, size = 0x4, scoped, tag = 'scoped memory for dereverb_loss.2']
    #allocation4 [shape = 'u8[512]{0}', space=vmem, size = 0x400, scoped, tag = 'output window, operand 1, single buffered']
    #allocation5 [shape = 's32[1]{0}', space=sflag, size = 0x4, scoped, tag = 'scoped memory for dereverb_loss.2']
    #allocation6 [shape = 'u8[512]{0}', space=vmem, size = 0x400, scoped, tag = 'output window, operand 2, single buffered']
    %12 = vsyncpa [#allocation3], 0
    %13 = vsyncpa [#allocation5], 0
    // Predicated region
    $region2: #{dereverb_loss.2} parent=1 // pred_check
      _
    $region3: #{dereverb_loss.2} parent=1 // pred_check_branch
      %15 = sbr.rel (0) target = $region5
    $region4: #{dereverb_loss.2} parent=1 // pred_region
      _
    $region5: #{dereverb_loss.2} parent=1 // pred_fallthru
      _
    // Predicated region
    $region6: #{dereverb_loss.2} parent=1 // pred_check
      _
    $region7: #{dereverb_loss.2} parent=1 // pred_check_branch
      %17 = sbr.rel (0) target = $region9
    $region8: #{dereverb_loss.2} parent=1 // pred_region
      _
    $region9: #{dereverb_loss.2} parent=1 // pred_fallthru
      _
    // Predicated region
    $region10: #{dereverb_loss.2} parent=1 // pred_check
      _
    $region11: #{dereverb_loss.2} parent=1 // pred_check_branch
      %19 = sbr.rel (0) target = $region13
    $region12: #{dereverb_loss.2} parent=1 // pred_region
      _
    $region13: #{dereverb_loss.2} parent=1 // pred_fallthru
      _
    // Predicated region
    $region14: #{dereverb_loss.2} parent=1 // pred_check
      _
    $region15: #{dereverb_loss.2} parent=1 // pred_check_branch
      %21 = sbr.rel (0) target = $region17
    $region16: #{dereverb_loss.2} parent=1 // pred_region
      _
    $region17: #{dereverb_loss.2} parent=1 // pred_fallthru
      _
    %v22 = vld [vmem:[%s2] sm:$0xff]
    %v23 = vld [vmem:[%s2 + $0x8] sm:$0xff]
    %v24 = vld [vmem:[%s2 + $0x10] sm:$0xff]
    %v25 = vld [vmem:[%s2 + $0x18] sm:$0xff]
    %v26 = vld [vmem:[%s2 + $0x20] sm:$0xff]
    %v27 = vld [vmem:[%s2 + $0x28] sm:$0xff]
    %v28 = vld [vmem:[%s2 + $0x30] sm:$0xff]
    %v29 = vld [vmem:[%s2 + $0x38] sm:$0xff]
    %v30 = vld [vmem:[%s2 + $0x40] sm:$0xff]
    %v31 = vld [vmem:[%s2 + $0x48] sm:$0xff]
    %v32 = vld [vmem:[%s2 + $0x50] sm:$0xff]
    %v33 = vld [vmem:[%s2 + $0x58] sm:$0xff]
    %v34 = vld [vmem:[%s2 + $0x60] sm:$0xff]
    %v35 = vld [vmem:[%s2 + $0x68] sm:$0xff]
    %v36 = vld [vmem:[%s2 + $0x70] sm:$0xff]
    %v37 = vld [vmem:[%s2 + $0x78] sm:$0xff]
    %v38 = vld [vmem:[%s2 + $0x80] sm:$0xff]
    %v39 = vld [vmem:[%s2 + $0x88] sm:$0xff]
    %v40 = vld [vmem:[%s2 + $0x90] sm:$0xff]
    %v41 = vld [vmem:[%s2 + $0x98] sm:$0xff]
    %v42 = vld [vmem:[%s2 + $0xa0] sm:$0xff]
    %v43 = vld [vmem:[%s2 + $0xa8] sm:$0xff]
    %v44 = vld [vmem:[%s2 + $0xb0] sm:$0xff]
    %v45 = vld [vmem:[%s2 + $0xb8] sm:$0xff]
    %v46 = vld [vmem:[%s2 + $0xc0] sm:$0xff]
    %v47 = vld [vmem:[%s2 + $0xc8] sm:$0xff]
    %v48 = vld [vmem:[%s2 + $0xd0] sm:$0xff]
    %v49 = vld [vmem:[%s2 + $0xd8] sm:$0xff]
    %v50 = vld [vmem:[%s2 + $0xe0] sm:$0xff]
    %v51 = vld [vmem:[%s2 + $0xe8] sm:$0xff]
    %v52 = vld [vmem:[%s2 + $0xf0] sm:$0xff]
    %v53 = vld [vmem:[%s2 + $0xf8] sm:$0xff]
    %v54 = vld [vmem:[%s0] sm:$0xff]
    %v55 = vld [vmem:[%s0 + $0x8] sm:$0xff]
    %v56 = vld [vmem:[%s0 + $0x10] sm:$0xff]
    %57 = vmatpush.msra.mxu0 %v52
    %58 = vmatpush.msra.mxu0 %v50
    %59 = vmatpush.msra.mxu0 %v48
    %60 = vmatpush.msra.mxu0 %v46
    %61 = vmatpush.msra.mxu0 %v44
    %62 = vmatpush.msra.mxu0 %v42
    %63 = vmatpush.msra.mxu0 %v40
    %64 = vmatpush.msra.mxu0 %v38
    %65 = vmatpush.msra.mxu0 %v36
    %66 = vmatpush.msra.mxu0 %v34
    %67 = vmatpush.msra.mxu0 %v32
    %68 = vmatpush.msra.mxu0 %v30
    %69 = vmatpush.msra.mxu0 %v28
    %70 = vmatpush.msra.mxu0 %v26
    %71 = vmatpush.msra.mxu0 %v24
    %72 = vmatpush.msra.mxu0 %v22
    %73 = vmatmul.f32.gmra.mxu0 %v54
    %v74 = vpop.f32.mrf.mxu0
    %v75 = vadd.f32 0.0, %v74
    %76 = vmatmul.f32.gmra.mxu0 %v55
    %v77 = vpop.f32.mrf.mxu0
    %v78 = vadd.f32 0.0, %v77
    %79 = vmatmul.f32.gmra.mxu0 %v56
    %v80 = vpop.f32.mrf.mxu0
    %v81 = vadd.f32 0.0, %v80
    %82 = vdwg.mxu0
    %83 = vmatpush.msra.mxu0 %v53
    %84 = vmatpush.msra.mxu0 %v51
    %85 = vmatpush.msra.mxu0 %v49
    %86 = vmatpush.msra.mxu0 %v47
    %87 = vmatpush.msra.mxu0 %v45
    %88 = vmatpush.msra.mxu0 %v43
    %89 = vmatpush.msra.mxu0 %v41
    %90 = vmatpush.msra.mxu0 %v39
    %91 = vmatpush.msra.mxu0 %v37
    %92 = vmatpush.msra.mxu0 %v35
    %93 = vmatpush.msra.mxu0 %v33
    %94 = vmatpush.msra.mxu0 %v31
    %95 = vmatpush.msra.mxu0 %v29
    %96 = vmatpush.msra.mxu0 %v27
    %97 = vmatpush.msra.mxu0 %v25
    %98 = vmatpush.msra.mxu0 %v23
    %99 = vmatmul.f32.gmra.mxu0 %v54
    %v100 = vpop.f32.mrf.mxu0
    %v101 = vadd.f32 0.0, %v100
    %102 = vmatmul.f32.gmra.mxu0 %v55
    %v103 = vpop.f32.mrf.mxu0
    %v104 = vadd.f32 0.0, %v103
    %105 = vmatmul.f32.gmra.mxu0 %v56
    %v106 = vpop.f32.mrf.mxu0
    %v107 = vadd.f32 0.0, %v106
    %108 = vdwg.mxu0
    %v109 = vld [vmem:[%s1] sm:$0xff]
    %v110 = vld [vmem:[%s1 + $0x8] sm:$0xff]
    %v111 = vld [vmem:[%s1 + $0x10] sm:$0xff]
    %112 = vmatpush.msra.mxu0 %v52
    %113 = vmatpush.msra.mxu0 %v50
    %114 = vmatpush.msra.mxu0 %v48
    %115 = vmatpush.msra.mxu0 %v46
    %116 = vmatpush.msra.mxu0 %v44
    %117 = vmatpush.msra.mxu0 %v42
    %118 = vmatpush.msra.mxu0 %v40
    %119 = vmatpush.msra.mxu0 %v38
    %120 = vmatpush.msra.mxu0 %v36
    %121 = vmatpush.msra.mxu0 %v34
    %122 = vmatpush.msra.mxu0 %v32
    %123 = vmatpush.msra.mxu0 %v30
    %124 = vmatpush.msra.mxu0 %v28
    %125 = vmatpush.msra.mxu0 %v26
    %126 = vmatpush.msra.mxu0 %v24
    %127 = vmatpush.msra.mxu0 %v22
    %128 = vmatmul.f32.gmra.mxu0 %v109
    %v129 = vpop.f32.mrf.mxu0
    %v130 = vadd.f32 0.0, %v129
    %131 = vmatmul.f32.gmra.mxu0 %v110
    %v132 = vpop.f32.mrf.mxu0
    %v133 = vadd.f32 0.0, %v132
    %134 = vmatmul.f32.gmra.mxu0 %v111
    %v135 = vpop.f32.mrf.mxu0
    %v136 = vadd.f32 0.0, %v135
    %137 = vdwg.mxu0
    %138 = vmatpush.msra.mxu0 %v53
    %139 = vmatpush.msra.mxu0 %v51
    %140 = vmatpush.msra.mxu0 %v49
    %141 = vmatpush.msra.mxu0 %v47
    %142 = vmatpush.msra.mxu0 %v45
    %143 = vmatpush.msra.mxu0 %v43
    %144 = vmatpush.msra.mxu0 %v41
    %145 = vmatpush.msra.mxu0 %v39
    %146 = vmatpush.msra.mxu0 %v37
    %147 = vmatpush.msra.mxu0 %v35
    %148 = vmatpush.msra.mxu0 %v33
    %149 = vmatpush.msra.mxu0 %v31
    %150 = vmatpush.msra.mxu0 %v29
    %151 = vmatpush.msra.mxu0 %v27
    %152 = vmatpush.msra.mxu0 %v25
    %153 = vmatpush.msra.mxu0 %v23
    %154 = vmatmul.f32.gmra.mxu0 %v109
    %v155 = vpop.f32.mrf.mxu0
    %v156 = vadd.f32 0.0, %v155
    %157 = vmatmul.f32.gmra.mxu0 %v110
    %v158 = vpop.f32.mrf.mxu0
    %v159 = vadd.f32 0.0, %v158
    %160 = vmatmul.f32.gmra.mxu0 %v111
    %v161 = vpop.f32.mrf.mxu0
    %v162 = vadd.f32 0.0, %v161
    %163 = vdwg.mxu0
    %v164 = vmul.f32 %v75, %v75
    %v165 = vmul.f32 %v78, %v78
    %v166 = vmul.f32 %v81, %v81
    %v167 = vmul.f32 %v101, %v101
    %v168 = vmul.f32 %v104, %v104
    %v169 = vmul.f32 %v107, %v107
    %v170 = vadd.f32 %v164, %v167
    %v171 = vadd.f32 %v165, %v168
    %v172 = vadd.f32 %v166, %v169
    %v173 = vmul.f32 %v130, %v130
    %v174 = vmul.f32 %v133, %v133
    %v175 = vmul.f32 %v136, %v136
    %v176 = vmul.f32 %v156, %v156
    %v177 = vmul.f32 %v159, %v159
    %v178 = vmul.f32 %v162, %v162
    %v179 = vadd.f32 %v173, %v176
    %v180 = vadd.f32 %v174, %v177
    %v181 = vadd.f32 %v175, %v178
    %v182 = vrsqrt.pop %v170
    %v183 = vmul.f32 %v182, %v170
    %v184 = vmul.f32 %v183, %v182
    %v185 = vmul.f32 0.5, %v184
    %v186 = vsub.f32 1.5, %v185
    %v187 = vmul.f32 %v182, %v186
    %v188 = vmul.f32 %v170, %v187
    %vm189 = vcmp.eq.f32.partialorder %v170, inf
    %v190 = vsel %vm189, %v170, %v188
    %vm191 = vcmp.eq.f32.partialorder %v170, 0.0
    %v192 = vand.u32 %v170, 2147483648
    %v193 = vsel %vm191, %v192, %v190
    %v194 = vrsqrt.pop %v171
    %v195 = vmul.f32 %v194, %v171
    %v196 = vmul.f32 %v195, %v194
    %v197 = vmul.f32 0.5, %v196
    %v198 = vsub.f32 1.5, %v197
    %v199 = vmul.f32 %v194, %v198
    %v200 = vmul.f32 %v171, %v199
    %vm201 = vcmp.eq.f32.partialorder %v171, inf
    %v202 = vsel %vm201, %v171, %v200
    %vm203 = vcmp.eq.f32.partialorder %v171, 0.0
    %v204 = vand.u32 %v171, 2147483648
    %v205 = vsel %vm203, %v204, %v202
    %v206 = vrsqrt.pop %v172
    %v207 = vmul.f32 %v206, %v172
    %v208 = vmul.f32 %v207, %v206
    %v209 = vmul.f32 0.5, %v208
    %v210 = vsub.f32 1.5, %v209
    %v211 = vmul.f32 %v206, %v210
    %v212 = vmul.f32 %v172, %v211
    %vm213 = vcmp.eq.f32.partialorder %v172, inf
    %v214 = vsel %vm213, %v172, %v212
    %vm215 = vcmp.eq.f32.partialorder %v172, 0.0
    %v216 = vand.u32 %v172, 2147483648
    %v217 = vsel %vm215, %v216, %v214
    %v218 = vrsqrt.pop %v179
    %v219 = vmul.f32 %v218, %v179
    %v220 = vmul.f32 %v219, %v218
    %v221 = vmul.f32 0.5, %v220
    %v222 = vsub.f32 1.5, %v221
    %v223 = vmul.f32 %v218, %v222
    %v224 = vmul.f32 %v179, %v223
    %vm225 = vcmp.eq.f32.partialorder %v179, inf
    %v226 = vsel %vm225, %v179, %v224
    %vm227 = vcmp.eq.f32.partialorder %v179, 0.0
    %v228 = vand.u32 %v179, 2147483648
    %v229 = vsel %vm227, %v228, %v226
    %v230 = vrsqrt.pop %v180
    %v231 = vmul.f32 %v230, %v180
    %v232 = vmul.f32 %v231, %v230
    %v233 = vmul.f32 0.5, %v232
    %v234 = vsub.f32 1.5, %v233
    %v235 = vmul.f32 %v230, %v234
    %v236 = vmul.f32 %v180, %v235
    %vm237 = vcmp.eq.f32.partialorder %v180, inf
    %v238 = vsel %vm237, %v180, %v236
    %vm239 = vcmp.eq.f32.partialorder %v180, 0.0
    %v240 = vand.u32 %v180, 2147483648
    %v241 = vsel %vm239, %v240, %v238
    %v242 = vrsqrt.pop %v181
    %v243 = vmul.f32 %v242, %v181
    %v244 = vmul.f32 %v243, %v242
    %v245 = vmul.f32 0.5, %v244
    %v246 = vsub.f32 1.5, %v245
    %v247 = vmul.f32 %v242, %v246
    %v248 = vmul.f32 %v181, %v247
    %vm249 = vcmp.eq.f32.partialorder %v181, inf
    %v250 = vsel %vm249, %v181, %v248
    %vm251 = vcmp.eq.f32.partialorder %v181, 0.0
    %v252 = vand.u32 %v181, 2147483648
    %v253 = vsel %vm251, %v252, %v250
    %v254 = vsub.f32 %v193, %v229
    %v255 = vsub.f32 %v205, %v241
    %v256 = vsub.f32 %v217, %v253
    %v257 = vand.u32 2147483647, %v254
    %v258 = vand.u32 2147483647, %v255
    %v259 = vand.u32 2147483647, %v256
    %v260 = vadd.f32 %v257, %v258
    %v261 = vadd.f32 %v260, %v259
    %262 = vadd.xlane.f32.xlu0 %v261
    %v263 = vpop.xlane.xlu0 %262
    %v264 = vrot.slane %v263, 4
    %v265 = vadd.f32 %v263, %v264
    %v266 = vrot.slane %v265, 2
    %v267 = vadd.f32 %v265, %v266
    %v268 = vrot.slane %v267, 1
    %v269 = vadd.f32 %v267, %v268
    %s270 = vtos %v269
    %v271 = vstv %s270
    %vm272 = vcmask 0
    %273 = vst.msk [vmem:[#allocation2] sm:$0x1] %vm272, %v271
    %v274 = vmul.f32 %v170, %v179
    %v275 = vmul.f32 %v171, %v180
    %v276 = vmul.f32 %v172, %v181
    %v277 = vmax.f32 %v274, 1e-24
    %v278 = vmax.f32 %v275, 1e-24
    %v279 = vmax.f32 %v276, 1e-24
    %v280 = vrsqrt.pop %v277
    %v281 = vmul.f32 %v280, %v277
    %v282 = vmul.f32 %v281, %v280
    %v283 = vmul.f32 0.5, %v282
    %v284 = vsub.f32 1.5, %v283
    %v285 = vmul.f32 %v280, %v284
    %vm286 = vweird.f32 %v277
    %vm287 = vweird.f32 %v280
    %vm288 = vmor %vm286, %vm287
    %v289 = vsel %vm288, %v280, %v285
    %v290 = vrsqrt.pop %v278
    %v291 = vmul.f32 %v290, %v278
    %v292 = vmul.f32 %v291, %v290
    %v293 = vmul.f32 0.5, %v292
    %v294 = vsub.f32 1.5, %v293
    %v295 = vmul.f32 %v290, %v294
    %vm296 = vweird.f32 %v278
    %vm297 = vweird.f32 %v290
    %vm298 = vmor %vm296, %vm297
    %v299 = vsel %vm298, %v290, %v295
    %v300 = vrsqrt.pop %v279
    %v301 = vmul.f32 %v300, %v279
    %v302 = vmul.f32 %v301, %v300
    %v303 = vmul.f32 0.5, %v302
    %v304 = vsub.f32 1.5, %v303
    %v305 = vmul.f32 %v300, %v304
    %vm306 = vweird.f32 %v279
    %vm307 = vweird.f32 %v300
    %vm308 = vmor %vm306, %vm307
    %v309 = vsel %vm308, %v300, %v305
    %v310 = vmul.f32 %v75, %v130
    %v311 = vmul.f32 %v78, %v133
    %v312 = vmul.f32 %v81, %v136
    %v313 = vmul.f32 %v101, %v156
    %v314 = vmul.f32 %v104, %v159
    %v315 = vmul.f32 %v107, %v162
    %v316 = vadd.f32 %v310, %v313
    %v317 = vadd.f32 %v311, %v314
    %v318 = vadd.f32 %v312, %v315
    %v319 = vmul.f32 %v316, %v289
    %v320 = vmul.f32 %v317, %v299
    %v321 = vmul.f32 %v318, %v309
    %v322 = vadd.f32 %v319, %v320
    %v323 = vadd.f32 %v322, %v321
    %324 = vadd.xlane.f32.xlu0 %v323
    %v325 = vpop.xlane.xlu0 %324
    %v326 = vrot.slane %v325, 4
    %v327 = vadd.f32 %v325, %v326
    %v328 = vrot.slane %v327, 2
    %v329 = vadd.f32 %v327, %v328
    %v330 = vrot.slane %v329, 1
    %v331 = vadd.f32 %v329, %v330
    %s332 = vtos %v331
    %v333 = vstv %s332
    %334 = vst.msk [vmem:[#allocation4] sm:$0x1] %vm272, %v333
    %v335 = vld [vmem:[%s3] sm:$0xff]
    %v336 = vld [vmem:[%s3 + $0x8] sm:$0xff]
    %v337 = vld [vmem:[%s3 + $0x10] sm:$0xff]
    %v338 = vld [vmem:[%s3 + $0x18] sm:$0xff]
    %v339 = vld [vmem:[%s3 + $0x20] sm:$0xff]
    %v340 = vld [vmem:[%s3 + $0x28] sm:$0xff]
    %v341 = vld [vmem:[%s3 + $0x30] sm:$0xff]
    %v342 = vld [vmem:[%s3 + $0x38] sm:$0xff]
    %v343 = vld [vmem:[%s3 + $0x40] sm:$0xff]
    %v344 = vld [vmem:[%s3 + $0x48] sm:$0xff]
    %v345 = vld [vmem:[%s3 + $0x50] sm:$0xff]
    %v346 = vld [vmem:[%s3 + $0x58] sm:$0xff]
    %v347 = vld [vmem:[%s3 + $0x60] sm:$0xff]
    %v348 = vld [vmem:[%s3 + $0x68] sm:$0xff]
    %v349 = vld [vmem:[%s3 + $0x70] sm:$0xff]
    %v350 = vld [vmem:[%s3 + $0x78] sm:$0xff]
    %351 = vmatpush.msra.mxu0 %v350
    %352 = vmatpush.msra.mxu0 %v349
    %353 = vmatpush.msra.mxu0 %v348
    %354 = vmatpush.msra.mxu0 %v347
    %355 = vmatpush.msra.mxu0 %v346
    %356 = vmatpush.msra.mxu0 %v345
    %357 = vmatpush.msra.mxu0 %v344
    %358 = vmatpush.msra.mxu0 %v343
    %359 = vmatpush.msra.mxu0 %v342
    %360 = vmatpush.msra.mxu0 %v341
    %361 = vmatpush.msra.mxu0 %v340
    %362 = vmatpush.msra.mxu0 %v339
    %363 = vmatpush.msra.mxu0 %v338
    %364 = vmatpush.msra.mxu0 %v337
    %365 = vmatpush.msra.mxu0 %v336
    %366 = vmatpush.msra.mxu0 %v335
    %367 = vmatmul.f32.gmra.mxu0 %v170
    %v368 = vpop.f32.mrf.mxu0
    %v369 = vadd.f32 1e-08, %v368
    %370 = vmatmul.f32.gmra.mxu0 %v171
    %v371 = vpop.f32.mrf.mxu0
    %v372 = vadd.f32 1e-08, %v371
    %373 = vmatmul.f32.gmra.mxu0 %v172
    %v374 = vpop.f32.mrf.mxu0
    %v375 = vadd.f32 1e-08, %v374
    %376 = vdwg.mxu0
    %v377 = vlog2.pop %v369
    %v378 = vmul.f32 %v377, 0.6931472
    %v379 = vlog2.pop %v372
    %v380 = vmul.f32 %v379, 0.6931472
    %v381 = vlog2.pop %v375
    %v382 = vmul.f32 %v381, 0.6931472
    %383 = vmatpush.msra.mxu0 %v350
    %384 = vmatpush.msra.mxu0 %v349
    %385 = vmatpush.msra.mxu0 %v348
    %386 = vmatpush.msra.mxu0 %v347
    %387 = vmatpush.msra.mxu0 %v346
    %388 = vmatpush.msra.mxu0 %v345
    %389 = vmatpush.msra.mxu0 %v344
    %390 = vmatpush.msra.mxu0 %v343
    %391 = vmatpush.msra.mxu0 %v342
    %392 = vmatpush.msra.mxu0 %v341
    %393 = vmatpush.msra.mxu0 %v340
    %394 = vmatpush.msra.mxu0 %v339
    %395 = vmatpush.msra.mxu0 %v338
    %396 = vmatpush.msra.mxu0 %v337
    %397 = vmatpush.msra.mxu0 %v336
    %398 = vmatpush.msra.mxu0 %v335
    %399 = vmatmul.f32.gmra.mxu0 %v179
    %v400 = vpop.f32.mrf.mxu0
    %v401 = vadd.f32 1e-08, %v400
    %402 = vmatmul.f32.gmra.mxu0 %v180
    %v403 = vpop.f32.mrf.mxu0
    %v404 = vadd.f32 1e-08, %v403
    %405 = vmatmul.f32.gmra.mxu0 %v181
    %v406 = vpop.f32.mrf.mxu0
    %v407 = vadd.f32 1e-08, %v406
    %408 = vdwg.mxu0
    %v409 = vlog2.pop %v401
    %v410 = vmul.f32 %v409, 0.6931472
    %v411 = vlog2.pop %v404
    %v412 = vmul.f32 %v411, 0.6931472
    %v413 = vlog2.pop %v407
    %v414 = vmul.f32 %v413, 0.6931472
    %v415 = vsub.f32 %v378, %v410
    %v416 = vsub.f32 %v380, %v412
    %v417 = vsub.f32 %v382, %v414
    %v418 = vand.u32 2147483647, %v415
    %v419 = vand.u32 2147483647, %v416
    %v420 = vand.u32 2147483647, %v417
    %v421 = vadd.f32 %v418, %v419
    %v422 = vadd.f32 %v421, %v420
    %423 = vadd.xlane.f32.xlu0 %v422
    %v424 = vpop.xlane.xlu0 %423
    %v425 = vrot.slane %v424, 4
    %v426 = vadd.f32 %v424, %v425
    %v427 = vrot.slane %v426, 2
    %v428 = vadd.f32 %v426, %v427
    %v429 = vrot.slane %v428, 1
    %v430 = vadd.f32 %v428, %v429
    %s431 = vtos %v430
    %v432 = vstv %s431
    %433 = vst.msk [vmem:[#allocation6] sm:$0x1] %vm272, %v432
    // Predicated region
    $region18: #{dereverb_loss.2} parent=1 // pred_check
      _
    $region19: #{dereverb_loss.2} parent=1 // pred_check_branch
      %435 = sbr.rel (0) target = $region21
    $region20: #{dereverb_loss.2} parent=1 // pred_region
      %437 = vsyncadd [#allocation3], 0
      %s439 = sshll.u32 [#allocation2], 4
      %s440 = int_to_ptr.vmem [resolvable:$true] %s439
      %s441 = sshll.u32 %s4, 4
      %s442 = int_to_ptr.hbm [resolvable:$true] %s441
      %444 = dma.vmem_to_hbm [thread:$0]  %s440, 16, %s442, [#allocation3]
    $region21: #{dereverb_loss.2} parent=1 // pred_fallthru
      _
    // Predicated region
    $region22: #{dereverb_loss.2} parent=1 // pred_check
      _
    $region23: #{dereverb_loss.2} parent=1 // pred_check_branch
      %446 = sbr.rel (0) target = $region25
    $region24: #{dereverb_loss.2} parent=1 // pred_region
      %448 = vsyncadd [#allocation5], 0
      %s450 = sshll.u32 [#allocation4], 4
      %s451 = int_to_ptr.vmem [resolvable:$true] %s450
      %s452 = sshll.u32 %s5, 4
      %s453 = int_to_ptr.hbm [resolvable:$true] %s452
      %455 = dma.vmem_to_hbm [thread:$0]  %s451, 16, %s453, [#allocation5]
    $region25: #{dereverb_loss.2} parent=1 // pred_fallthru
      _
    // Predicated region
    $region26: #{dereverb_loss.2} parent=1 // pred_check
      _
    $region27: #{dereverb_loss.2} parent=1 // pred_check_branch
      %457 = sbr.rel (0) target = $region29
    $region28: #{dereverb_loss.2} parent=1 // pred_region
      %459 = vsyncadd [#allocation5], 0
      %s461 = sshll.u32 [#allocation6], 4
      %s462 = int_to_ptr.vmem [resolvable:$true] %s461
      %s463 = sshll.u32 %s6, 4
      %s464 = int_to_ptr.hbm [resolvable:$true] %s463
      %466 = dma.vmem_to_hbm [thread:$0]  %s462, 16, %s464, [#allocation5]
    $region29: #{dereverb_loss.2} parent=1 // pred_fallthru
      _
    // Predicated region
    $region30: #{dereverb_loss.2} parent=1 // pred_check
      _
    $region31: #{dereverb_loss.2} parent=1 // pred_check_branch
      %468 = sbr.rel (0) target = $region33
    $region32: #{dereverb_loss.2} parent=1 // pred_region
      %470 = dma.done [#allocation3], 16
    $region33: #{dereverb_loss.2} parent=1 // pred_fallthru
      _
    // Predicated region
    $region34: #{dereverb_loss.2} parent=1 // pred_check
      _
    $region35: #{dereverb_loss.2} parent=1 // pred_check_branch
      %472 = sbr.rel (0) target = $region37
    $region36: #{dereverb_loss.2} parent=1 // pred_region
      %474 = dma.done [#allocation5], 16
    $region37: #{dereverb_loss.2} parent=1 // pred_fallthru
      _
    // Predicated region
    $region38: #{dereverb_loss.2} parent=1 // pred_check
      _
    $region39: #{dereverb_loss.2} parent=1 // pred_check_branch
      %476 = sbr.rel (0) target = $region41
    $region40: #{dereverb_loss.2} parent=1 // pred_region
      %478 = dma.done [#allocation5], 16
    $region41: #{dereverb_loss.2} parent=1 // pred_fallthru
      _
    %479 = vsyncpa [#allocation3], 1
    %480 = vsyncpa [#allocation5], 1

</llo_original>
